<compile_context>
chip_gen: v7x
topology: tpu7x:2x2x1
jax: 0.10.0
libtpu: 0.0.40
codegen_flags: <defaults>
</compile_context>

<pallas_src>
import jax
import jax.numpy as jnp
from jax.experimental import pallas as pl
from jax.experimental.pallas import tpu as pltpu


def gnn_kernel(ei_col_ref, dst_row_ref, x_ref, ea_ref, wsq_ref, rows_ref,
               fc2w_ref, fc2b_ref, out_ref):
    E = ei_col_ref.shape[0]
    N = x_ref.shape[0]

    # Build one-hot gather / scatter operators on the VPU from int32 edge
    # indices (compare/select work hides under the serial MXU chain; removes
    # the dense (E,N)/(N,E) f32 selector DMAs).
    dst_col = ei_col_ref[:, 0:1]                                  # (E, 1) i32
    src_col = ei_col_ref[:, 1:2]                                  # (E, 1) i32
    col_ids = jax.lax.broadcasted_iota(jnp.int32, (E, 2 * N), 1)
    s_cat = ((col_ids == dst_col).astype(jnp.float32)
             + (col_ids == src_col + N).astype(jnp.float32))      # (E, 2N)
    row_ids = jax.lax.broadcasted_iota(jnp.int32, (N, E), 0)
    scat = (row_ids == dst_row_ref[...]).astype(jnp.float32)      # (N, E)

    def row(k):                                                   # (1, H) static slice
        return rows_ref[k:k + 1, :]

    def edge_conv_block(h_in, l):
        base = 5 * l
        # node MLP first Linear + ReLU
        hrelu = jnp.maximum(
            jnp.dot(h_in, wsq_ref[base + 0], preferred_element_type=jnp.float32)
            + row(base + 0), 0.0)                                 # (N, H)
        # node MLP second Linear -- only needed for the "+ h" residual
        # (Wn2 is folded into the edge weights below, so this is off the
        # critical dependent-matmul chain)
        h = (jnp.dot(hrelu, wsq_ref[base + 1], preferred_element_type=jnp.float32)
             + row(base + 1))                                     # (N, H)
        # weight-before-gather: folded edge weights applied on (N,H), then a
        # single fused one-hot gather (E,2N)@(2N,H) produces h_i- + h_j-terms.
        hw = jnp.concatenate(
            [jnp.dot(hrelu, wsq_ref[base + 2], preferred_element_type=jnp.float32),
             jnp.dot(hrelu, wsq_ref[base + 3], preferred_element_type=jnp.float32)],
            axis=0)                                               # (2N, H)
        pre = jnp.dot(s_cat, hw, preferred_element_type=jnp.float32) + ea_ref[l]
        # edge MLP ReLU + second Linear, scatter-add to destination nodes
        m = (jnp.dot(jnp.maximum(pre, 0.0), wsq_ref[base + 4],
                     preferred_element_type=jnp.float32) + row(base + 2))
        conv = jnp.dot(scat, m, preferred_element_type=jnp.float32) + h
        # eval BatchNorm folded to per-channel affine, then ReLU; dropout = id
        return jnp.maximum(conv * row(base + 3) + row(base + 4), 0.0)

    x0 = x_ref[...]                                               # (N, H) zero-padded
    x1 = edge_conv_block(x0, 0)
    x2 = edge_conv_block(x1, 1) + x1
    x3 = edge_conv_block(x2, 2) + x2

    # global_mean_pool: 1/N already folded into fc1_w -> plain node sum
    pooled = jnp.sum(x3, axis=0, keepdims=True)                   # (1, H)
    hfc = jnp.maximum(
        jnp.dot(pooled, wsq_ref[15], preferred_element_type=jnp.float32)
        + row(15), 0.0)
    final = (jnp.dot(hfc, fc2w_ref[...], preferred_element_type=jnp.float32)
             + fc2b_ref[...])                                     # (1, 128) lane-dense
    out_ref[...] = jnp.broadcast_to(final, out_ref.shape)


def prepare_inputs(x, edge_index, edge_attr, layers, fc1_w, fc1_b, fc2_w, fc2_b,
                   hidden_dim, bn_eps=1e-5, lane=128):
    """Host-side folding / operand consolidation."""
    N = x.shape[0]
    E = edge_index.shape[1]
    H = hidden_dim
    src = edge_index[0].astype(jnp.int32)
    dst = edge_index[1].astype(jnp.int32)

    # tiny int32 operands; dense one-hot selectors are built in-kernel
    ei_col = jnp.stack([dst, src], axis=1)                  # (E, 2): [dst, src]
    dst_row = dst.reshape(1, E)                             # (1, E)

    # zero-pad node features so layer-1's node-MLP weight is (H, H) too
    x_pad = jnp.pad(x, ((0, 0), (0, H - x.shape[1])))

    wsq, rows, ea_bias = [], [], []
    for lp in layers:
        wn1 = lp["wn1"]
        if wn1.shape[0] < H:
            wn1 = jnp.pad(wn1, ((0, H - wn1.shape[0]), (0, 0)))
        we1_i = lp["we1"][:H]                               # multiplies h_i
        we1_j = lp["we1"][H:2 * H]                          # multiplies h_j
        w_ea = lp["we1"][2 * H:2 * H + 1]                   # (1, H) edge_attr row
        # fold node-MLP second Linear into the edge-MLP layer-1 weights
        wfold_i = lp["wn2"] @ we1_i
        wfold_j = lp["wn2"] @ we1_j
        scale = lp["gamma"] / jnp.sqrt(lp["var"] + bn_eps)
        shift = lp["beta"] - lp["mean"] * scale
        wsq += [wn1, lp["wn2"], wfold_i, wfold_j, lp["we2"]]
        rows += [lp["bn1"], lp["bn2"], lp["be2"], scale, shift]
        # per-edge precomputed term: edge_attr row + be1 + folded bn2 terms
        ea_bias.append(edge_attr @ w_ea + lp["be1"]
                       + lp["bn2"] @ we1_i + lp["bn2"] @ we1_j)   # (E, H)
    wsq.append(fc1_w / N)                                   # fold 1/N of mean pool
    rows.append(fc1_b)

    wsq = jnp.stack(wsq)                                    # (16, H, H)
    rows = jnp.concatenate(rows, axis=0)                    # (16, H) 2-D slab
    ea_bias = jnp.stack(ea_bias)                            # (3, E, H)

    fc2_w_pad = jnp.pad(fc2_w, ((0, 0), (0, lane - fc2_w.shape[1])))
    fc2_b_pad = jnp.pad(fc2_b, ((0, 0), (0, lane - fc2_b.shape[1])))
    return ei_col, dst_row, x_pad, ea_bias, wsq, rows, fc2_w_pad, fc2_b_pad


def gnn_forward(ei_col, dst_row, x_pad, ea_bias, wsq, rows, fc2_w, fc2_b,
                output_dim):
    # TODO(synk): multi-graph batches (segment mean pool over `batch`) not
    # implemented; this is the `batch is None` single-graph path. For many
    # graphs, add a leading grid axis over graphs (weights resident via
    # index_map -> block 0) and mark it "parallel" to use both v7x TCs.
    vmem = pl.BlockSpec(memory_space=pltpu.MemorySpace.VMEM)
    out = pl.pallas_call(
        gnn_kernel,
        out_shape=jax.ShapeDtypeStruct((8, 128), jnp.float32),
        in_specs=[vmem] * 8,
        out_specs=vmem,
    )(ei_col, dst_row, x_pad, ea_bias, wsq, rows, fc2_w, fc2_b)
    return out[:1, :output_dim]


def reference_forward(x, edge_index, edge_attr, layers, fc1_w, fc1_b,
                      fc2_w, fc2_b, bn_eps=1e-5):
    """Pure-JAX mirror of the PyTorch module's predict() path."""
    src, dst = edge_index[0], edge_index[1]

    def edge_conv(h_in, lp):
        h = jnp.maximum(h_in @ lp["wn1"] + lp["bn1"], 0.0) @ lp["wn2"] + lp["bn2"]
        ef = jnp.concatenate([h[dst], h[src], edge_attr], axis=1)
        m = jnp.maximum(ef @ lp["we1"] + lp["be1"], 0.0) @ lp["we2"] + lp["be2"]
        agg = jnp.zeros_like(h).at[dst].add(m)
        out = agg + h
        z = (out - lp["mean"]) / jnp.sqrt(lp["var"] + bn_eps) * lp["gamma"] + lp["beta"]
        return jnp.maximum(z, 0.0)

    x1 = edge_conv(x, layers[0])
    x2 = edge_conv(x1, layers[1]) + x1
    x3 = edge_conv(x2, layers[2]) + x2
    pooled = jnp.mean(x3, axis=0, keepdims=True)
    h = jnp.maximum(pooled @ fc1_w + fc1_b, 0.0)
    return h @ fc2_w + fc2_b


if __name__ == "__main__":
    N, E = 16, 40                      # nodes, edges (single graph)
    input_dim, hidden_dim, output_dim = 4, 32, 1
    H = hidden_dim

    key = jax.random.PRNGKey(0)
    keys = iter(jax.random.split(key, 16))

    x = jax.random.normal(next(keys), (N, input_dim), dtype=jnp.float32)
    edge_index = jax.random.randint(next(keys), (2, E), 0, N)
    edge_attr = jax.random.uniform(next(keys), (E, 1), dtype=jnp.float32)

    def linear(k, fan_in, fan_out):
        kw, kb = jax.random.split(k)
        bound = 1.0 / (fan_in ** 0.5)
        w = jax.random.uniform(kw, (fan_in, fan_out), jnp.float32, -bound, bound)
        b = jax.random.uniform(kb, (1, fan_out), jnp.float32, -bound, bound)
        return w, b

    def bn_params(k, dim):
        k1, k2, k3, k4 = jax.random.split(k, 4)
        gamma = 1.0 + 0.1 * jax.random.normal(k1, (1, dim), jnp.float32)
        beta = 0.1 * jax.random.normal(k2, (1, dim), jnp.float32)
        mean = 0.1 * jax.random.normal(k3, (1, dim), jnp.float32)
        var = 0.5 + jax.random.uniform(k4, (1, dim), jnp.float32)
        return gamma, beta, mean, var

    def make_layer(k, in_dim):
        k1, k2, k3, k4, k5 = jax.random.split(k, 5)
        wn1, bn1 = linear(k1, in_dim, H)
        wn2, bn2 = linear(k2, H, H)
        we1, be1 = linear(k3, 2 * H + 1, H)
        we2, be2 = linear(k4, H, H)
        gamma, beta, mean, var = bn_params(k5, H)
        return dict(wn1=wn1, bn1=bn1, wn2=wn2, bn2=bn2,
                    we1=we1, be1=be1, we2=we2, be2=be2,
                    gamma=gamma, beta=beta, mean=mean, var=var)

    layers = [make_layer(next(keys), input_dim),
              make_layer(next(keys), H),
              make_layer(next(keys), H)]
    fc1_w, fc1_b = linear(next(keys), H, H)
    fc2_w, fc2_b = linear(next(keys), H, output_dim)

    folded = prepare_inputs(x, edge_index, edge_attr, layers,
                            fc1_w, fc1_b, fc2_w, fc2_b, H)
    out = gnn_forward(*folded, output_dim)
    jax.block_until_ready(out)

    ref = reference_forward(x, edge_index, edge_attr, layers,
                            fc1_w, fc1_b, fc2_w, fc2_b)
    assert out.shape == (1, output_dim), out.shape
    assert jnp.allclose(out, ref, atol=1e-3, rtol=1e-3), (out, ref)
    print("KERNEL_OK")
</pallas_src>

<mosaic_0001>
module attributes {stable_mosaic.version = 11 : i64} {
  func.func @gnn_kernel(%arg0: memref<40x2xi32, #tpu.memory_space<vmem>>, %arg1: memref<1x40xi32, #tpu.memory_space<vmem>>, %arg2: memref<16x32xf32, #tpu.memory_space<vmem>>, %arg3: memref<3x40x32xf32, #tpu.memory_space<vmem>>, %arg4: memref<16x32x32xf32, #tpu.memory_space<vmem>>, %arg5: memref<16x32xf32, #tpu.memory_space<vmem>>, %arg6: memref<32x128xf32, #tpu.memory_space<vmem>>, %arg7: memref<1x128xf32, #tpu.memory_space<vmem>>, %arg8: memref<8x128xf32, #tpu.memory_space<vmem>>) attributes {dimension_semantics = [], scalar_prefetch = 0 : i64, scratch_operands = 0 : i64, tpu.core_type = #tpu.core_type<tc>} {
    %c0 = arith.constant 0 : index
    %c0_0 = arith.constant 0 : index
    %0 = vector.load %arg0[%c0, %c0_0] : memref<40x2xi32, #tpu.memory_space<vmem>>, vector<40x1xi32>
    %c0_1 = arith.constant 0 : index
    %c1 = arith.constant 1 : index
    %1 = vector.load %arg0[%c0_1, %c1] : memref<40x2xi32, #tpu.memory_space<vmem>>, vector<40x1xi32>
    %2 = tpu.iota {dimensions = array<i32: 1>} : vector<40x32xi32>
    %3 = vector.broadcast %0 : vector<40x1xi32> to vector<40x32xi32>
    %4 = arith.cmpi eq, %2, %3 : vector<40x32xi32>
    %5 = arith.extui %4 : vector<40x32xi1> to vector<40x32xi32>
    %6 = arith.sitofp %5 : vector<40x32xi32> to vector<40x32xf32>
    %c16_i32 = arith.constant 16 : i32
    %7 = vector.broadcast %c16_i32 : i32 to vector<40x1xi32>
    %8 = arith.addi %1, %7 : vector<40x1xi32>
    %9 = vector.broadcast %8 : vector<40x1xi32> to vector<40x32xi32>
    %10 = arith.cmpi eq, %2, %9 : vector<40x32xi32>
    %11 = arith.extui %10 : vector<40x32xi1> to vector<40x32xi32>
    %12 = arith.sitofp %11 : vector<40x32xi32> to vector<40x32xf32>
    %13 = arith.addf %6, %12 : vector<40x32xf32>
    %14 = tpu.iota {dimensions = array<i32: 0>} : vector<16x40xi32>
    %c0_2 = arith.constant 0 : index
    %c0_3 = arith.constant 0 : index
    %15 = vector.load %arg1[%c0_2, %c0_3] : memref<1x40xi32, #tpu.memory_space<vmem>>, vector<1x40xi32>
    %16 = vector.broadcast %15 : vector<1x40xi32> to vector<16x40xi32>
    %17 = arith.cmpi eq, %14, %16 : vector<16x40xi32>
    %18 = arith.extui %17 : vector<16x40xi1> to vector<16x40xi32>
    %19 = arith.sitofp %18 : vector<16x40xi32> to vector<16x40xf32>
    %c0_4 = arith.constant 0 : index
    %c0_5 = arith.constant 0 : index
    %20 = vector.load %arg2[%c0_4, %c0_5] : memref<16x32xf32, #tpu.memory_space<vmem>>, vector<16x32xf32>
    %c0_6 = arith.constant 0 : index
    %c0_7 = arith.constant 0 : index
    %c0_8 = arith.constant 0 : index
    %21 = vector.load %arg4[%c0_6, %c0_7, %c0_8] : memref<16x32x32xf32, #tpu.memory_space<vmem>>, vector<1x32x32xf32>
    %22 = vector.shape_cast %21 : vector<1x32x32xf32> to vector<32x32xf32>
    %cst = arith.constant dense<0.000000e+00> : vector<16x32xf32>
    %23 = tpu.matmul %20, %22, %cst {dimension_numbers = #tpu.dot_dimension_numbers<[1], [0], [0], [1], [0, 0, 1, 1], [], []>} : vector<16x32xf32>, vector<32x32xf32>, vector<16x32xf32> -> vector<16x32xf32>
    %c0_9 = arith.constant 0 : index
    %c0_10 = arith.constant 0 : index
    %24 = vector.load %arg5[%c0_9, %c0_10] : memref<16x32xf32, #tpu.memory_space<vmem>>, vector<1x32xf32>
    %25 = vector.broadcast %24 : vector<1x32xf32> to vector<16x32xf32>
    %26 = arith.addf %23, %25 : vector<16x32xf32>
    %cst_11 = arith.constant 0.000000e+00 : f32
    %27 = vector.broadcast %cst_11 : f32 to vector<16x32xf32>
    %28 = arith.maximumf %26, %27 : vector<16x32xf32>
    %c1_12 = arith.constant 1 : index
    %c0_13 = arith.constant 0 : index
    %c0_14 = arith.constant 0 : index
    %29 = vector.load %arg4[%c1_12, %c0_13, %c0_14] : memref<16x32x32xf32, #tpu.memory_space<vmem>>, vector<1x32x32xf32>
    %30 = vector.shape_cast %29 : vector<1x32x32xf32> to vector<32x32xf32>
    %cst_15 = arith.constant dense<0.000000e+00> : vector<16x32xf32>
    %31 = tpu.matmul %28, %30, %cst_15 {dimension_numbers = #tpu.dot_dimension_numbers<[1], [0], [0], [1], [0, 0, 1, 1], [], []>} : vector<16x32xf32>, vector<32x32xf32>, vector<16x32xf32> -> vector<16x32xf32>
    %c1_16 = arith.constant 1 : index
    %c0_17 = arith.constant 0 : index
    %32 = vector.load %arg5[%c1_16, %c0_17] : memref<16x32xf32, #tpu.memory_space<vmem>>, vector<1x32xf32>
    %33 = vector.broadcast %32 : vector<1x32xf32> to vector<16x32xf32>
    %34 = arith.addf %31, %33 : vector<16x32xf32>
    %c2 = arith.constant 2 : index
    %c0_18 = arith.constant 0 : index
    %c0_19 = arith.constant 0 : index
    %35 = vector.load %arg4[%c2, %c0_18, %c0_19] : memref<16x32x32xf32, #tpu.memory_space<vmem>>, vector<1x32x32xf32>
    %36 = vector.shape_cast %35 : vector<1x32x32xf32> to vector<32x32xf32>
    %cst_20 = arith.constant dense<0.000000e+00> : vector<16x32xf32>
    %37 = tpu.matmul %28, %36, %cst_20 {dimension_numbers = #tpu.dot_dimension_numbers<[1], [0], [0], [1], [0, 0, 1, 1], [], []>} : vector<16x32xf32>, vector<32x32xf32>, vector<16x32xf32> -> vector<16x32xf32>
    %c3 = arith.constant 3 : index
    %c0_21 = arith.constant 0 : index
    %c0_22 = arith.constant 0 : index
    %38 = vector.load %arg4[%c3, %c0_21, %c0_22] : memref<16x32x32xf32, #tpu.memory_space<vmem>>, vector<1x32x32xf32>
    %39 = vector.shape_cast %38 : vector<1x32x32xf32> to vector<32x32xf32>
    %cst_23 = arith.constant dense<0.000000e+00> : vector<16x32xf32>
    %40 = tpu.matmul %28, %39, %cst_23 {dimension_numbers = #tpu.dot_dimension_numbers<[1], [0], [0], [1], [0, 0, 1, 1], [], []>} : vector<16x32xf32>, vector<32x32xf32>, vector<16x32xf32> -> vector<16x32xf32>
    %41 = tpu.concatenate %37, %40 in 0 : vector<16x32xf32>, vector<16x32xf32> -> vector<32x32xf32>
    %cst_24 = arith.constant dense<0.000000e+00> : vector<40x32xf32>
    %42 = tpu.matmul %13, %41, %cst_24 {dimension_numbers = #tpu.dot_dimension_numbers<[1], [0], [0], [1], [0, 0, 1, 1], [], []>} : vector<40x32xf32>, vector<32x32xf32>, vector<40x32xf32> -> vector<40x32xf32>
    %c0_25 = arith.constant 0 : index
    %c0_26 = arith.constant 0 : index
    %c0_27 = arith.constant 0 : index
    %43 = vector.load %arg3[%c0_25, %c0_26, %c0_27] : memref<3x40x32xf32, #tpu.memory_space<vmem>>, vector<1x40x32xf32>
    %44 = vector.shape_cast %43 : vector<1x40x32xf32> to vector<40x32xf32>
    %45 = arith.addf %42, %44 : vector<40x32xf32>
    %cst_28 = arith.constant 0.000000e+00 : f32
    %46 = vector.broadcast %cst_28 : f32 to vector<40x32xf32>
    %47 = arith.maximumf %45, %46 : vector<40x32xf32>
    %c4 = arith.constant 4 : index
    %c0_29 = arith.constant 0 : index
    %c0_30 = arith.constant 0 : index
    %48 = vector.load %arg4[%c4, %c0_29, %c0_30] : memref<16x32x32xf32, #tpu.memory_space<vmem>>, vector<1x32x32xf32>
    %49 = vector.shape_cast %48 : vector<1x32x32xf32> to vector<32x32xf32>
    %cst_31 = arith.constant dense<0.000000e+00> : vector<40x32xf32>
    %50 = tpu.matmul %47, %49, %cst_31 {dimension_numbers = #tpu.dot_dimension_numbers<[1], [0], [0], [1], [0, 0, 1, 1], [], []>} : vector<40x32xf32>, vector<32x32xf32>, vector<40x32xf32> -> vector<40x32xf32>
    %c2_32 = arith.constant 2 : index
    %c0_33 = arith.constant 0 : index
    %51 = vector.load %arg5[%c2_32, %c0_33] : memref<16x32xf32, #tpu.memory_space<vmem>>, vector<1x32xf32>
    %52 = vector.broadcast %51 : vector<1x32xf32> to vector<40x32xf32>
    %53 = arith.addf %50, %52 : vector<40x32xf32>
    %cst_34 = arith.constant dense<0.000000e+00> : vector<16x32xf32>
    %54 = tpu.matmul %19, %53, %cst_34 {dimension_numbers = #tpu.dot_dimension_numbers<[1], [0], [0], [1], [0, 0, 1, 1], [], []>} : vector<16x40xf32>, vector<40x32xf32>, vector<16x32xf32> -> vector<16x32xf32>
    %55 = arith.addf %54, %34 : vector<16x32xf32>
    %c3_35 = arith.constant 3 : index
    %c0_36 = arith.constant 0 : index
    %56 = vector.load %arg5[%c3_35, %c0_36] : memref<16x32xf32, #tpu.memory_space<vmem>>, vector<1x32xf32>
    %57 = vector.broadcast %56 : vector<1x32xf32> to vector<16x32xf32>
    %58 = arith.mulf %55, %57 : vector<16x32xf32>
    %c4_37 = arith.constant 4 : index
    %c0_38 = arith.constant 0 : index
    %59 = vector.load %arg5[%c4_37, %c0_38] : memref<16x32xf32, #tpu.memory_space<vmem>>, vector<1x32xf32>
    %60 = vector.broadcast %59 : vector<1x32xf32> to vector<16x32xf32>
    %61 = arith.addf %58, %60 : vector<16x32xf32>
    %cst_39 = arith.constant 0.000000e+00 : f32
    %62 = vector.broadcast %cst_39 : f32 to vector<16x32xf32>
    %63 = arith.maximumf %61, %62 : vector<16x32xf32>
    %c5 = arith.constant 5 : index
    %c0_40 = arith.constant 0 : index
    %c0_41 = arith.constant 0 : index
    %64 = vector.load %arg4[%c5, %c0_40, %c0_41] : memref<16x32x32xf32, #tpu.memory_space<vmem>>, vector<1x32x32xf32>
    %65 = vector.shape_cast %64 : vector<1x32x32xf32> to vector<32x32xf32>
    %cst_42 = arith.constant dense<0.000000e+00> : vector<16x32xf32>
    %66 = tpu.matmul %63, %65, %cst_42 {dimension_numbers = #tpu.dot_dimension_numbers<[1], [0], [0], [1], [0, 0, 1, 1], [], []>} : vector<16x32xf32>, vector<32x32xf32>, vector<16x32xf32> -> vector<16x32xf32>
    %c5_43 = arith.constant 5 : index
    %c0_44 = arith.constant 0 : index
    %67 = vector.load %arg5[%c5_43, %c0_44] : memref<16x32xf32, #tpu.memory_space<vmem>>, vector<1x32xf32>
    %68 = vector.broadcast %67 : vector<1x32xf32> to vector<16x32xf32>
    %69 = arith.addf %66, %68 : vector<16x32xf32>
    %cst_45 = arith.constant 0.000000e+00 : f32
    %70 = vector.broadcast %cst_45 : f32 to vector<16x32xf32>
    %71 = arith.maximumf %69, %70 : vector<16x32xf32>
    %c6 = arith.constant 6 : index
    %c0_46 = arith.constant 0 : index
    %c0_47 = arith.constant 0 : index
    %72 = vector.load %arg4[%c6, %c0_46, %c0_47] : memref<16x32x32xf32, #tpu.memory_space<vmem>>, vector<1x32x32xf32>
    %73 = vector.shape_cast %72 : vector<1x32x32xf32> to vector<32x32xf32>
    %cst_48 = arith.constant dense<0.000000e+00> : vector<16x32xf32>
    %74 = tpu.matmul %71, %73, %cst_48 {dimension_numbers = #tpu.dot_dimension_numbers<[1], [0], [0], [1], [0, 0, 1, 1], [], []>} : vector<16x32xf32>, vector<32x32xf32>, vector<16x32xf32> -> vector<16x32xf32>
    %c6_49 = arith.constant 6 : index
    %c0_50 = arith.constant 0 : index
    %75 = vector.load %arg5[%c6_49, %c0_50] : memref<16x32xf32, #tpu.memory_space<vmem>>, vector<1x32xf32>
    %76 = vector.broadcast %75 : vector<1x32xf32> to vector<16x32xf32>
    %77 = arith.addf %74, %76 : vector<16x32xf32>
    %c7 = arith.constant 7 : index
    %c0_51 = arith.constant 0 : index
    %c0_52 = arith.constant 0 : index
    %78 = vector.load %arg4[%c7, %c0_51, %c0_52] : memref<16x32x32xf32, #tpu.memory_space<vmem>>, vector<1x32x32xf32>
    %79 = vector.shape_cast %78 : vector<1x32x32xf32> to vector<32x32xf32>
    %cst_53 = arith.constant dense<0.000000e+00> : vector<16x32xf32>
    %80 = tpu.matmul %71, %79, %cst_53 {dimension_numbers = #tpu.dot_dimension_numbers<[1], [0], [0], [1], [0, 0, 1, 1], [], []>} : vector<16x32xf32>, vector<32x32xf32>, vector<16x32xf32> -> vector<16x32xf32>
    %c8 = arith.constant 8 : index
    %c0_54 = arith.constant 0 : index
    %c0_55 = arith.constant 0 : index
    %81 = vector.load %arg4[%c8, %c0_54, %c0_55] : memref<16x32x32xf32, #tpu.memory_space<vmem>>, vector<1x32x32xf32>
    %82 = vector.shape_cast %81 : vector<1x32x32xf32> to vector<32x32xf32>
    %cst_56 = arith.constant dense<0.000000e+00> : vector<16x32xf32>
    %83 = tpu.matmul %71, %82, %cst_56 {dimension_numbers = #tpu.dot_dimension_numbers<[1], [0], [0], [1], [0, 0, 1, 1], [], []>} : vector<16x32xf32>, vector<32x32xf32>, vector<16x32xf32> -> vector<16x32xf32>
    %84 = tpu.concatenate %80, %83 in 0 : vector<16x32xf32>, vector<16x32xf32> -> vector<32x32xf32>
    %cst_57 = arith.constant dense<0.000000e+00> : vector<40x32xf32>
    %85 = tpu.matmul %13, %84, %cst_57 {dimension_numbers = #tpu.dot_dimension_numbers<[1], [0], [0], [1], [0, 0, 1, 1], [], []>} : vector<40x32xf32>, vector<32x32xf32>, vector<40x32xf32> -> vector<40x32xf32>
    %c1_58 = arith.constant 1 : index
    %c0_59 = arith.constant 0 : index
    %c0_60 = arith.constant 0 : index
    %86 = vector.load %arg3[%c1_58, %c0_59, %c0_60] : memref<3x40x32xf32, #tpu.memory_space<vmem>>, vector<1x40x32xf32>
    %87 = vector.shape_cast %86 : vector<1x40x32xf32> to vector<40x32xf32>
    %88 = arith.addf %85, %87 : vector<40x32xf32>
    %cst_61 = arith.constant 0.000000e+00 : f32
    %89 = vector.broadcast %cst_61 : f32 to vector<40x32xf32>
    %90 = arith.maximumf %88, %89 : vector<40x32xf32>
    %c9 = arith.constant 9 : index
    %c0_62 = arith.constant 0 : index
    %c0_63 = arith.constant 0 : index
    %91 = vector.load %arg4[%c9, %c0_62, %c0_63] : memref<16x32x32xf32, #tpu.memory_space<vmem>>, vector<1x32x32xf32>
    %92 = vector.shape_cast %91 : vector<1x32x32xf32> to vector<32x32xf32>
    %cst_64 = arith.constant dense<0.000000e+00> : vector<40x32xf32>
    %93 = tpu.matmul %90, %92, %cst_64 {dimension_numbers = #tpu.dot_dimension_numbers<[1], [0], [0], [1], [0, 0, 1, 1], [], []>} : vector<40x32xf32>, vector<32x32xf32>, vector<40x32xf32> -> vector<40x32xf32>
    %c7_65 = arith.constant 7 : index
    %c0_66 = arith.constant 0 : index
    %94 = vector.load %arg5[%c7_65, %c0_66] : memref<16x32xf32, #tpu.memory_space<vmem>>, vector<1x32xf32>
    %95 = vector.broadcast %94 : vector<1x32xf32> to vector<40x32xf32>
    %96 = arith.addf %93, %95 : vector<40x32xf32>
    %cst_67 = arith.constant dense<0.000000e+00> : vector<16x32xf32>
    %97 = tpu.matmul %19, %96, %cst_67 {dimension_numbers = #tpu.dot_dimension_numbers<[1], [0], [0], [1], [0, 0, 1, 1], [], []>} : vector<16x40xf32>, vector<40x32xf32>, vector<16x32xf32> -> vector<16x32xf32>
    %98 = arith.addf %97, %77 : vector<16x32xf32>
    %c8_68 = arith.constant 8 : index
    %c0_69 = arith.constant 0 : index
    %99 = vector.load %arg5[%c8_68, %c0_69] : memref<16x32xf32, #tpu.memory_space<vmem>>, vector<1x32xf32>
    %100 = vector.broadcast %99 : vector<1x32xf32> to vector<16x32xf32>
    %101 = arith.mulf %98, %100 : vector<16x32xf32>
    %c9_70 = arith.constant 9 : index
    %c0_71 = arith.constant 0 : index
    %102 = vector.load %arg5[%c9_70, %c0_71] : memref<16x32xf32, #tpu.memory_space<vmem>>, vector<1x32xf32>
    %103 = vector.broadcast %102 : vector<1x32xf32> to vector<16x32xf32>
    %104 = arith.addf %101, %103 : vector<16x32xf32>
    %cst_72 = arith.constant 0.000000e+00 : f32
    %105 = vector.broadcast %cst_72 : f32 to vector<16x32xf32>
    %106 = arith.maximumf %104, %105 : vector<16x32xf32>
    %107 = arith.addf %106, %63 : vector<16x32xf32>
    %c10 = arith.constant 10 : index
    %c0_73 = arith.constant 0 : index
    %c0_74 = arith.constant 0 : index
    %108 = vector.load %arg4[%c10, %c0_73, %c0_74] : memref<16x32x32xf32, #tpu.memory_space<vmem>>, vector<1x32x32xf32>
    %109 = vector.shape_cast %108 : vector<1x32x32xf32> to vector<32x32xf32>
    %cst_75 = arith.constant dense<0.000000e+00> : vector<16x32xf32>
    %110 = tpu.matmul %107, %109, %cst_75 {dimension_numbers = #tpu.dot_dimension_numbers<[1], [0], [0], [1], [0, 0, 1, 1], [], []>} : vector<16x32xf32>, vector<32x32xf32>, vector<16x32xf32> -> vector<16x32xf32>
    %c10_76 = arith.constant 10 : index
    %c0_77 = arith.constant 0 : index
    %111 = vector.load %arg5[%c10_76, %c0_77] : memref<16x32xf32, #tpu.memory_space<vmem>>, vector<1x32xf32>
    %112 = vector.broadcast %111 : vector<1x32xf32> to vector<16x32xf32>
    %113 = arith.addf %110, %112 : vector<16x32xf32>
    %cst_78 = arith.constant 0.000000e+00 : f32
    %114 = vector.broadcast %cst_78 : f32 to vector<16x32xf32>
    %115 = arith.maximumf %113, %114 : vector<16x32xf32>
    %c11 = arith.constant 11 : index
    %c0_79 = arith.constant 0 : index
    %c0_80 = arith.constant 0 : index
    %116 = vector.load %arg4[%c11, %c0_79, %c0_80] : memref<16x32x32xf32, #tpu.memory_space<vmem>>, vector<1x32x32xf32>
    %117 = vector.shape_cast %116 : vector<1x32x32xf32> to vector<32x32xf32>
    %cst_81 = arith.constant dense<0.000000e+00> : vector<16x32xf32>
    %118 = tpu.matmul %115, %117, %cst_81 {dimension_numbers = #tpu.dot_dimension_numbers<[1], [0], [0], [1], [0, 0, 1, 1], [], []>} : vector<16x32xf32>, vector<32x32xf32>, vector<16x32xf32> -> vector<16x32xf32>
    %c11_82 = arith.constant 11 : index
    %c0_83 = arith.constant 0 : index
    %119 = vector.load %arg5[%c11_82, %c0_83] : memref<16x32xf32, #tpu.memory_space<vmem>>, vector<1x32xf32>
    %120 = vector.broadcast %119 : vector<1x32xf32> to vector<16x32xf32>
    %121 = arith.addf %118, %120 : vector<16x32xf32>
    %c12 = arith.constant 12 : index
    %c0_84 = arith.constant 0 : index
    %c0_85 = arith.constant 0 : index
    %122 = vector.load %arg4[%c12, %c0_84, %c0_85] : memref<16x32x32xf32, #tpu.memory_space<vmem>>, vector<1x32x32xf32>
    %123 = vector.shape_cast %122 : vector<1x32x32xf32> to vector<32x32xf32>
    %cst_86 = arith.constant dense<0.000000e+00> : vector<16x32xf32>
    %124 = tpu.matmul %115, %123, %cst_86 {dimension_numbers = #tpu.dot_dimension_numbers<[1], [0], [0], [1], [0, 0, 1, 1], [], []>} : vector<16x32xf32>, vector<32x32xf32>, vector<16x32xf32> -> vector<16x32xf32>
    %c13 = arith.constant 13 : index
    %c0_87 = arith.constant 0 : index
    %c0_88 = arith.constant 0 : index
    %125 = vector.load %arg4[%c13, %c0_87, %c0_88] : memref<16x32x32xf32, #tpu.memory_space<vmem>>, vector<1x32x32xf32>
    %126 = vector.shape_cast %125 : vector<1x32x32xf32> to vector<32x32xf32>
    %cst_89 = arith.constant dense<0.000000e+00> : vector<16x32xf32>
    %127 = tpu.matmul %115, %126, %cst_89 {dimension_numbers = #tpu.dot_dimension_numbers<[1], [0], [0], [1], [0, 0, 1, 1], [], []>} : vector<16x32xf32>, vector<32x32xf32>, vector<16x32xf32> -> vector<16x32xf32>
    %128 = tpu.concatenate %124, %127 in 0 : vector<16x32xf32>, vector<16x32xf32> -> vector<32x32xf32>
    %cst_90 = arith.constant dense<0.000000e+00> : vector<40x32xf32>
    %129 = tpu.matmul %13, %128, %cst_90 {dimension_numbers = #tpu.dot_dimension_numbers<[1], [0], [0], [1], [0, 0, 1, 1], [], []>} : vector<40x32xf32>, vector<32x32xf32>, vector<40x32xf32> -> vector<40x32xf32>
    %c2_91 = arith.constant 2 : index
    %c0_92 = arith.constant 0 : index
    %c0_93 = arith.constant 0 : index
    %130 = vector.load %arg3[%c2_91, %c0_92, %c0_93] : memref<3x40x32xf32, #tpu.memory_space<vmem>>, vector<1x40x32xf32>
    %131 = vector.shape_cast %130 : vector<1x40x32xf32> to vector<40x32xf32>
    %132 = arith.addf %129, %131 : vector<40x32xf32>
    %cst_94 = arith.constant 0.000000e+00 : f32
    %133 = vector.broadcast %cst_94 : f32 to vector<40x32xf32>
    %134 = arith.maximumf %132, %133 : vector<40x32xf32>
    %c14 = arith.constant 14 : index
    %c0_95 = arith.constant 0 : index
    %c0_96 = arith.constant 0 : index
    %135 = vector.load %arg4[%c14, %c0_95, %c0_96] : memref<16x32x32xf32, #tpu.memory_space<vmem>>, vector<1x32x32xf32>
    %136 = vector.shape_cast %135 : vector<1x32x32xf32> to vector<32x32xf32>
    %cst_97 = arith.constant dense<0.000000e+00> : vector<40x32xf32>
    %137 = tpu.matmul %134, %136, %cst_97 {dimension_numbers = #tpu.dot_dimension_numbers<[1], [0], [0], [1], [0, 0, 1, 1], [], []>} : vector<40x32xf32>, vector<32x32xf32>, vector<40x32xf32> -> vector<40x32xf32>
    %c12_98 = arith.constant 12 : index
    %c0_99 = arith.constant 0 : index
    %138 = vector.load %arg5[%c12_98, %c0_99] : memref<16x32xf32, #tpu.memory_space<vmem>>, vector<1x32xf32>
    %139 = vector.broadcast %138 : vector<1x32xf32> to vector<40x32xf32>
    %140 = arith.addf %137, %139 : vector<40x32xf32>
    %cst_100 = arith.constant dense<0.000000e+00> : vector<16x32xf32>
    %141 = tpu.matmul %19, %140, %cst_100 {dimension_numbers = #tpu.dot_dimension_numbers<[1], [0], [0], [1], [0, 0, 1, 1], [], []>} : vector<16x40xf32>, vector<40x32xf32>, vector<16x32xf32> -> vector<16x32xf32>
    %142 = arith.addf %141, %121 : vector<16x32xf32>
    %c13_101 = arith.constant 13 : index
    %c0_102 = arith.constant 0 : index
    %143 = vector.load %arg5[%c13_101, %c0_102] : memref<16x32xf32, #tpu.memory_space<vmem>>, vector<1x32xf32>
    %144 = vector.broadcast %143 : vector<1x32xf32> to vector<16x32xf32>
    %145 = arith.mulf %142, %144 : vector<16x32xf32>
    %c14_103 = arith.constant 14 : index
    %c0_104 = arith.constant 0 : index
    %146 = vector.load %arg5[%c14_103, %c0_104] : memref<16x32xf32, #tpu.memory_space<vmem>>, vector<1x32xf32>
    %147 = vector.broadcast %146 : vector<1x32xf32> to vector<16x32xf32>
    %148 = arith.addf %145, %147 : vector<16x32xf32>
    %cst_105 = arith.constant 0.000000e+00 : f32
    %149 = vector.broadcast %cst_105 : f32 to vector<16x32xf32>
    %150 = arith.maximumf %148, %149 : vector<16x32xf32>
    %151 = arith.addf %150, %107 : vector<16x32xf32>
    %cst_106 = arith.constant dense<0.000000e+00> : vector<32xf32>
    %152 = vector.multi_reduction <add>, %151, %cst_106 [0] : vector<16x32xf32> to vector<32xf32>
    %153 = vector.shape_cast %152 : vector<32xf32> to vector<1x32xf32>
    %c15 = arith.constant 15 : index
    %c0_107 = arith.constant 0 : index
    %c0_108 = arith.constant 0 : index
    %154 = vector.load %arg4[%c15, %c0_107, %c0_108] : memref<16x32x32xf32, #tpu.memory_space<vmem>>, vector<1x32x32xf32>
    %155 = vector.shape_cast %154 : vector<1x32x32xf32> to vector<32x32xf32>
    %cst_109 = arith.constant dense<0.000000e+00> : vector<1x32xf32>
    %156 = tpu.matmul %153, %155, %cst_109 {dimension_numbers = #tpu.dot_dimension_numbers<[1], [0], [0], [1], [0, 0, 1, 1], [], []>} : vector<1x32xf32>, vector<32x32xf32>, vector<1x32xf32> -> vector<1x32xf32>
    %c15_110 = arith.constant 15 : index
    %c0_111 = arith.constant 0 : index
    %157 = vector.load %arg5[%c15_110, %c0_111] : memref<16x32xf32, #tpu.memory_space<vmem>>, vector<1x32xf32>
    %158 = arith.addf %156, %157 : vector<1x32xf32>
    %cst_112 = arith.constant 0.000000e+00 : f32
    %159 = vector.broadcast %cst_112 : f32 to vector<1x32xf32>
    %160 = arith.maximumf %158, %159 : vector<1x32xf32>
    %c0_113 = arith.constant 0 : index
    %c0_114 = arith.constant 0 : index
    %161 = vector.load %arg6[%c0_113, %c0_114] : memref<32x128xf32, #tpu.memory_space<vmem>>, vector<32x128xf32>
    %cst_115 = arith.constant dense<0.000000e+00> : vector<1x128xf32>
    %162 = tpu.matmul %160, %161, %cst_115 {dimension_numbers = #tpu.dot_dimension_numbers<[1], [0], [0], [1], [0, 0, 1, 1], [], []>} : vector<1x32xf32>, vector<32x128xf32>, vector<1x128xf32> -> vector<1x128xf32>
    %c0_116 = arith.constant 0 : index
    %c0_117 = arith.constant 0 : index
    %163 = vector.load %arg7[%c0_116, %c0_117] : memref<1x128xf32, #tpu.memory_space<vmem>>, vector<1x128xf32>
    %164 = arith.addf %162, %163 : vector<1x128xf32>
    %165 = vector.shape_cast %164 : vector<1x128xf32> to vector<1x128xf32>
    %166 = vector.broadcast %165 : vector<1x128xf32> to vector<8x128xf32>
    %c0_118 = arith.constant 0 : index
    %c0_119 = arith.constant 0 : index
    %167 = vector.load %arg8[%c0_118, %c0_119] : memref<8x128xf32, #tpu.memory_space<vmem>>, vector<8x128xf32>
    tpu.vector_store %arg8[%c0_118, %c0_119], %166 {strides = array<i32>} : memref<8x128xf32, #tpu.memory_space<vmem>>, vector<8x128xf32>,
    return
  }
}

</mosaic_0001>

<llo_original>
// kernel: tpu_custom_call.1
$region0: #{tpu_custom_call.1}
  #allocation0 [shape = 'u32[]', space=smem, size = 0x4, offset = 0x4, fixed_abs, tag = 'smem constant byte address 0x4 - core index']
  #allocation1 [shape = 'u32[144,128]{1,0:T(1,128)}', space=vmem, size = 0x12000, scoped, tag = 'internal scratch']
  %s0 = inlined_call_operand.vmem [shape: s32[40,2], index: 0, kind: input, shape index: {}]
  %s1 = inlined_call_operand.vmem [shape: s32[1,40], index: 1, kind: input, shape index: {}]
  %s2 = inlined_call_operand.vmem [shape: f32[16,32], index: 2, kind: input, shape index: {}]
  %s3 = inlined_call_operand.vmem [shape: f32[3,40,32], index: 3, kind: input, shape index: {}]
  %s4 = inlined_call_operand.hbm [shape: f32[16,32,32], index: 4, kind: input, shape index: {}]
  %s5 = inlined_call_operand.vmem [shape: f32[16,32], index: 5, kind: input, shape index: {}]
  %s6 = inlined_call_operand.vmem [shape: f32[32,128], index: 6, kind: input, shape index: {}]
  %s7 = inlined_call_operand.vmem [shape: f32[1,128], index: 7, kind: input, shape index: {}]
  %s8 = inlined_call_operand.hbm [shape: f32[8,128], index: 8, kind: output, shape index: {}]
  %s9 = sld [smem:[#allocation0]]
  $region46: #{tpu_custom_call.1} parent=0
    _
  %s11 = ssub.s32 1, %s9
  %s12 = scalar_select 0, %s11, %s9
  $region1: #{tpu_custom_call.1} parent=0
    #allocation2 [shape = 'u8[262144]{0}', space=vmem, size = 0x40000, scoped, tag = 'input window, operand 4, single buffered']
    #allocation3 [shape = 's32[1]{0}', space=sflag, size = 0x4, scoped, tag = 'scoped memory for tpu_custom_call.1']
    #allocation4 [shape = 's32[1]{0}', space=sflag, size = 0x4, scoped, tag = 'scoped memory for tpu_custom_call.1']
    #allocation5 [shape = 'u8[4096]{0}', space=vmem, size = 0x1000, scoped, tag = 'output window, operand 0, single buffered']
    %13 = vsyncpa [#allocation3], 0
    %14 = vsyncpa [#allocation4], 0
    // Predicated region
    $region2: #{tpu_custom_call.1} parent=1 // pred_check
      _
    $region3: #{tpu_custom_call.1} parent=1 // pred_check_branch
      %16 = sbr.rel (0) target = $region5
    $region4: #{tpu_custom_call.1} parent=1 // pred_region
      _
    $region5: #{tpu_custom_call.1} parent=1 // pred_fallthru
      _
    // Predicated region
    $region6: #{tpu_custom_call.1} parent=1 // pred_check
      _
    $region7: #{tpu_custom_call.1} parent=1 // pred_check_branch
      %18 = sbr.rel (0) target = $region9
    $region8: #{tpu_custom_call.1} parent=1 // pred_region
      _
    $region9: #{tpu_custom_call.1} parent=1 // pred_fallthru
      _
    // Predicated region
    $region10: #{tpu_custom_call.1} parent=1 // pred_check
      _
    $region11: #{tpu_custom_call.1} parent=1 // pred_check_branch
      %20 = sbr.rel (0) target = $region13
    $region12: #{tpu_custom_call.1} parent=1 // pred_region
      _
    $region13: #{tpu_custom_call.1} parent=1 // pred_fallthru
      _
    // Predicated region
    $region14: #{tpu_custom_call.1} parent=1 // pred_check
      _
    $region15: #{tpu_custom_call.1} parent=1 // pred_check_branch
      %22 = sbr.rel (0) target = $region17
    $region16: #{tpu_custom_call.1} parent=1 // pred_region
      _
    $region17: #{tpu_custom_call.1} parent=1 // pred_fallthru
      _
    // Predicated region
    $region18: #{tpu_custom_call.1} parent=1 // pred_check
      _
    $region19: #{tpu_custom_call.1} parent=1 // pred_check_branch
      %24 = sbr.rel (0) target = $region21
    $region20: #{tpu_custom_call.1} parent=1 // pred_region
      %s26 = ssub.s32 8192, 8192
      %27 = vsyncadd [#allocation3], %s26
      %s28 = sshll.u32 [#allocation2], 4
      %s29 = int_to_ptr.vmem [resolvable:$true] %s28
      %34 = dma.hbm_to_vmem [thread:$0]  %s4, 8192, %s29, [#allocation3], 128, 128, 8
    $region21: #{tpu_custom_call.1} parent=1 // pred_fallthru
      _
    // Predicated region
    $region22: #{tpu_custom_call.1} parent=1 // pred_check
      _
    $region23: #{tpu_custom_call.1} parent=1 // pred_check_branch
      %36 = sbr.rel (0) target = $region25
    $region24: #{tpu_custom_call.1} parent=1 // pred_region
      _
    $region25: #{tpu_custom_call.1} parent=1 // pred_fallthru
      _
    // Predicated region
    $region26: #{tpu_custom_call.1} parent=1 // pred_check
      _
    $region27: #{tpu_custom_call.1} parent=1 // pred_check_branch
      %38 = sbr.rel (0) target = $region29
    $region28: #{tpu_custom_call.1} parent=1 // pred_region
      _
    $region29: #{tpu_custom_call.1} parent=1 // pred_fallthru
      _
    // Predicated region
    $region30: #{tpu_custom_call.1} parent=1 // pred_check
      _
    $region31: #{tpu_custom_call.1} parent=1 // pred_check_branch
      %40 = sbr.rel (0) target = $region33
    $region32: #{tpu_custom_call.1} parent=1 // pred_region
      _
    $region33: #{tpu_custom_call.1} parent=1 // pred_fallthru
      _
    // Predicated region
    $region34: #{tpu_custom_call.1} parent=1 // pred_check
      _
    $region35: #{tpu_custom_call.1} parent=1 // pred_check_branch
      %42 = sbr.rel (0) target = $region37
    $region36: #{tpu_custom_call.1} parent=1 // pred_region
      %43 = dma.done [#allocation3], 8192
    $region37: #{tpu_custom_call.1} parent=1 // pred_fallthru
      _
    %v44 = vld [vmem:[%s0] sm:$0xff]
    %v45 = vld [vmem:[%s0 + $0x8] sm:$0xff]
    %v46 = vld [vmem:[%s0 + $0x10] sm:$0xff]
    %v47 = vld [vmem:[%s0 + $0x18] sm:$0xff]
    %v48 = vld [vmem:[%s0 + $0x20] sm:$0xff]
    %v49 = vlaneseq
    %v50 = vand.u32 %v49, 127
    %51 = vset.pattern.permute.xlu0 0
    %52 = vperm.xlu0 %51, %v44
    %v53 = vpop.permute.xlu0 %52
    %54 = vset.pattern.permute.xlu0 0
    %55 = vperm.xlu0 %54, %v45
    %v56 = vpop.permute.xlu0 %55
    %57 = vset.pattern.permute.xlu0 0
    %58 = vperm.xlu0 %57, %v46
    %v59 = vpop.permute.xlu0 %58
    %60 = vset.pattern.permute.xlu0 0
    %61 = vperm.xlu0 %60, %v47
    %v62 = vpop.permute.xlu0 %61
    %63 = vset.pattern.permute.xlu0 0
    %64 = vperm.xlu0 %63, %v48
    %v65 = vpop.permute.xlu0 %64
    %vm66 = vcmp.eq.s32.totalorder %v50, %v53
    %vm67 = vcmp.eq.s32.totalorder %v50, %v56
    %vm68 = vcmp.eq.s32.totalorder %v50, %v59
    %vm69 = vcmp.eq.s32.totalorder %v50, %v62
    %vm70 = vcmp.eq.s32.totalorder %v50, %v65
    %v71 = vsel %vm66, 1, 0
    %v72 = vsel %vm67, 1, 0
    %v73 = vsel %vm68, 1, 0
    %v74 = vsel %vm69, 1, 0
    %v75 = vsel %vm70, 1, 0
    %v76 = vcvt.s32.f32 %v71
    %v77 = vcvt.s32.f32 %v72
    %v78 = vcvt.s32.f32 %v73
    %v79 = vcvt.s32.f32 %v74
    %v80 = vcvt.s32.f32 %v75
    %v81 = vadd.s32 %v44, 16
    %v82 = vadd.s32 %v45, 16
    %v83 = vadd.s32 %v46, 16
    %v84 = vadd.s32 %v47, 16
    %v85 = vadd.s32 %v48, 16
    %86 = vset.pattern.permute.xlu0 1
    %87 = vperm.xlu0 %86, %v81
    %v88 = vpop.permute.xlu0 %87
    %89 = vset.pattern.permute.xlu0 1
    %90 = vperm.xlu0 %89, %v82
    %v91 = vpop.permute.xlu0 %90
    %92 = vset.pattern.permute.xlu0 1
    %93 = vperm.xlu0 %92, %v83
    %v94 = vpop.permute.xlu0 %93
    %95 = vset.pattern.permute.xlu0 1
    %96 = vperm.xlu0 %95, %v84
    %v97 = vpop.permute.xlu0 %96
    %98 = vset.pattern.permute.xlu0 1
    %99 = vperm.xlu0 %98, %v85
    %v100 = vpop.permute.xlu0 %99
    %vm101 = vcmp.eq.s32.totalorder %v50, %v88
    %vm102 = vcmp.eq.s32.totalorder %v50, %v91
    %vm103 = vcmp.eq.s32.totalorder %v50, %v94
    %vm104 = vcmp.eq.s32.totalorder %v50, %v97
    %vm105 = vcmp.eq.s32.totalorder %v50, %v100
    %v106 = vsel %vm101, 1, 0
    %v107 = vsel %vm102, 1, 0
    %v108 = vsel %vm103, 1, 0
    %v109 = vsel %vm104, 1, 0
    %v110 = vsel %vm105, 1, 0
    %v111 = vcvt.s32.f32 %v106
    %v112 = vcvt.s32.f32 %v107
    %v113 = vcvt.s32.f32 %v108
    %v114 = vcvt.s32.f32 %v109
    %v115 = vcvt.s32.f32 %v110
    %v116 = vadd.f32 %v76, %v111
    %v117 = vadd.f32 %v77, %v112
    %v118 = vadd.f32 %v78, %v113
    %v119 = vadd.f32 %v79, %v114
    %v120 = vadd.f32 %v80, %v115
    %v121 = vlaneseq
    %v122 = vshrl.u32 %v121, 7
    %v123 = vadd.s32 %v122, 8
    %v124 = vld [vmem:[%s1] sm:$0x1]
    %v125 = vlaneseq
    %v126 = vshrl.u32 %v125, 7
    %v127 = vsub.s32 0, %v126
    %v128 = vrot.slane %v124, %v127
    %vm129 = vcmp.eq.s32.totalorder %v122, %v128
    %vm130 = vcmp.eq.s32.totalorder %v123, %v128
    %v131 = vsel %vm129, 1, 0
    %v132 = vsel %vm130, 1, 0
    %v133 = vcvt.s32.f32 %v131
    %v134 = vcvt.s32.f32 %v132
    %v135 = vld [vmem:[%s2] sm:$0xff]
    %v136 = vld [vmem:[%s2 + $0x8] sm:$0xff]
    %v137 = vld [vmem:[#allocation2] sm:$0xff]
    %v138 = vld [vmem:[#allocation2 + $0x8] sm:$0xff]
    %v139 = vld [vmem:[#allocation2 + $0x10] sm:$0xff]
    %v140 = vld [vmem:[#allocation2 + $0x18] sm:$0xff]
    %v141 = vld [vmem:[%s5] sm:$0x1]
    %v142 = vlaneseq
    %v143 = vshrl.u32 %v142, 7
    %v144 = vsub.s32 0, %v143
    %v145 = vrot.slane %v141, %v144
    %vm146 = vcmask 261120
    %v148 = vsel %vm146, %v135, 0
    %v151 = vsel %vm146, %v136, 0
    %153 = vmatprep.subr.mxu0 0.0
    %154 = vmatpush1.msra.mxu0 %v137
    %155 = vmatprep.subr.mxu0 0.0
    %156 = vmatpush1.msra.mxu0 %v138
    %157 = vmatprep.subr.mxu0 0.0
    %158 = vmatpush1.msra.mxu0 %v139
    %159 = vmatprep.subr.mxu0 0.0
    %160 = vmatpush1.msra.mxu0 %v140
    %161 = vmatprep.subr.mxu0 0.0
    %162 = vmatpush1.msra.mxu0 0.0
    %163 = vmatprep.subr.mxu0 0.0
    %164 = vmatpush1.msra.mxu0 0.0
    %165 = vmatprep.subr.mxu0 0.0
    %166 = vmatpush1.msra.mxu0 0.0
    %167 = vmatprep.subr.mxu0 0.0
    %168 = vmatpush1.msra.mxu0 0.0
    %169 = vmatprep.subr.mxu0 0.0
    %170 = vmatpush1.msra.mxu0 0.0
    %171 = vmatprep.subr.mxu0 0.0
    %172 = vmatpush1.msra.mxu0 0.0
    %173 = vmatprep.subr.mxu0 0.0
    %174 = vmatpush1.msra.mxu0 0.0
    %175 = vmatprep.subr.mxu0 0.0
    %176 = vmatpush1.msra.mxu0 0.0
    %177 = vmatprep.subr.mxu0 0.0
    %178 = vmatpush1.msra.mxu0 0.0
    %179 = vmatprep.subr.mxu0 0.0
    %180 = vmatpush1.msra.mxu0 0.0
    %181 = vmatprep.subr.mxu0 0.0
    %182 = vmatpush1.msra.mxu0 0.0
    %183 = vmatprep.subr.mxu0 0.0
    %184 = vmatpush1.msra.mxu0 0.0
    %185 = vmatprep.subr.mxu0 0.0
    %186 = vmatpush1.msra.mxu0 0.0
    %187 = vmatprep.subr.mxu0 0.0
    %188 = vmatpush1.msra.mxu0 0.0
    %189 = vmatprep.subr.mxu0 0.0
    %190 = vmatpush1.msra.mxu0 0.0
    %191 = vmatprep.subr.mxu0 0.0
    %192 = vmatpush1.msra.mxu0 0.0
    %193 = vmatprep.subr.mxu0 0.0
    %194 = vmatpush1.msra.mxu0 0.0
    %195 = vmatprep.subr.mxu0 0.0
    %196 = vmatpush1.msra.mxu0 0.0
    %197 = vmatprep.subr.mxu0 0.0
    %198 = vmatpush1.msra.mxu0 0.0
    %199 = vmatprep.subr.mxu0 0.0
    %200 = vmatpush1.msra.mxu0 0.0
    %201 = vmatprep.subr.mxu0 0.0
    %202 = vmatpush1.msra.mxu0 0.0
    %203 = vmatprep.subr.mxu0 0.0
    %204 = vmatpush1.msra.mxu0 0.0
    %205 = vmatprep.subr.mxu0 0.0
    %206 = vmatpush1.msra.mxu0 0.0
    %207 = vmatprep.subr.mxu0 0.0
    %208 = vmatpush1.msra.mxu0 0.0
    %209 = vmatprep.subr.mxu0 0.0
    %210 = vmatpush1.msra.mxu0 0.0
    %211 = vmatprep.subr.mxu0 0.0
    %212 = vmatpush1.msra.mxu0 0.0
    %213 = vmatprep.subr.mxu0 0.0
    %214 = vmatpush1.msra.mxu0 0.0
    %215 = vmatprep.subr.mxu0 0.0
    %216 = vmatpush1.msra.mxu0 0.0
    %217 = vmatprep.mubr.f32.mxu0 0.0
    %218 = vmatmul.mubr.f32.gmra.mrb[0].mxu0 %v148
    %v219 = vpop.f32.mrb[0].mxu0
    %v220 = vadd.f32 %v145, %v219
    %v221 = vpop.f32.mrb[0].mxu0
    %222 = vmatprep.mubr.f32.mxu0 0.0
    %223 = vmatmul.mubr.f32.gmra.mrb[0].mxu0 %v151
    %v224 = vpop.f32.mrb[0].mxu0
    %v225 = vadd.f32 %v145, %v224
    %v226 = vpop.f32.mrb[0].mxu0
    %227 = vdwg.mxu0
    %v228 = vmax.f32 %v220, 0.0
    %v229 = vmax.f32 %v225, 0.0
    %s230 = scalar_lea.vmem [#allocation2], 32
    %v231 = vld [vmem:[%s230] sm:$0xff]
    %v232 = vld [vmem:[%s230 + $0x8] sm:$0xff]
    %v233 = vld [vmem:[%s230 + $0x10] sm:$0xff]
    %v234 = vld [vmem:[%s230 + $0x18] sm:$0xff]
    %v235 = vld [vmem:[%s5 + $0x1] sm:$0x1]
    %v236 = vlaneseq
    %v237 = vshrl.u32 %v236, 7
    %v238 = vsub.s32 0, %v237
    %v239 = vrot.slane %v235, %v238
    %v241 = vsel %vm146, %v228, 0
    %v244 = vsel %vm146, %v229, 0
    %246 = vmatprep.subr.mxu0 0.0
    %247 = vmatpush1.msra.mxu0 %v231
    %248 = vmatprep.subr.mxu0 0.0
    %249 = vmatpush1.msra.mxu0 %v232
    %250 = vmatprep.subr.mxu0 0.0
    %251 = vmatpush1.msra.mxu0 %v233
    %252 = vmatprep.subr.mxu0 0.0
    %253 = vmatpush1.msra.mxu0 %v234
    %254 = vmatprep.subr.mxu0 0.0
    %255 = vmatpush1.msra.mxu0 0.0
    %256 = vmatprep.subr.mxu0 0.0
    %257 = vmatpush1.msra.mxu0 0.0
    %258 = vmatprep.subr.mxu0 0.0
    %259 = vmatpush1.msra.mxu0 0.0
    %260 = vmatprep.subr.mxu0 0.0
    %261 = vmatpush1.msra.mxu0 0.0
    %262 = vmatprep.subr.mxu0 0.0
    %263 = vmatpush1.msra.mxu0 0.0
    %264 = vmatprep.subr.mxu0 0.0
    %265 = vmatpush1.msra.mxu0 0.0
    %266 = vmatprep.subr.mxu0 0.0
    %267 = vmatpush1.msra.mxu0 0.0
    %268 = vmatprep.subr.mxu0 0.0
    %269 = vmatpush1.msra.mxu0 0.0
    %270 = vmatprep.subr.mxu0 0.0
    %271 = vmatpush1.msra.mxu0 0.0
    %272 = vmatprep.subr.mxu0 0.0
    %273 = vmatpush1.msra.mxu0 0.0
    %274 = vmatprep.subr.mxu0 0.0
    %275 = vmatpush1.msra.mxu0 0.0
    %276 = vmatprep.subr.mxu0 0.0
    %277 = vmatpush1.msra.mxu0 0.0
    %278 = vmatprep.subr.mxu0 0.0
    %279 = vmatpush1.msra.mxu0 0.0
    %280 = vmatprep.subr.mxu0 0.0
    %281 = vmatpush1.msra.mxu0 0.0
    %282 = vmatprep.subr.mxu0 0.0
    %283 = vmatpush1.msra.mxu0 0.0
    %284 = vmatprep.subr.mxu0 0.0
    %285 = vmatpush1.msra.mxu0 0.0
    %286 = vmatprep.subr.mxu0 0.0
    %287 = vmatpush1.msra.mxu0 0.0
    %288 = vmatprep.subr.mxu0 0.0
    %289 = vmatpush1.msra.mxu0 0.0
    %290 = vmatprep.subr.mxu0 0.0
    %291 = vmatpush1.msra.mxu0 0.0
    %292 = vmatprep.subr.mxu0 0.0
    %293 = vmatpush1.msra.mxu0 0.0
    %294 = vmatprep.subr.mxu0 0.0
    %295 = vmatpush1.msra.mxu0 0.0
    %296 = vmatprep.subr.mxu0 0.0
    %297 = vmatpush1.msra.mxu0 0.0
    %298 = vmatprep.subr.mxu0 0.0
    %299 = vmatpush1.msra.mxu0 0.0
    %300 = vmatprep.subr.mxu0 0.0
    %301 = vmatpush1.msra.mxu0 0.0
    %302 = vmatprep.subr.mxu0 0.0
    %303 = vmatpush1.msra.mxu0 0.0
    %304 = vmatprep.subr.mxu0 0.0
    %305 = vmatpush1.msra.mxu0 0.0
    %306 = vmatprep.subr.mxu0 0.0
    %307 = vmatpush1.msra.mxu0 0.0
    %308 = vmatprep.subr.mxu0 0.0
    %309 = vmatpush1.msra.mxu0 0.0
    %310 = vmatprep.mubr.f32.mxu0 0.0
    %311 = vmatmul.mubr.f32.gmra.mrb[0].mxu0 %v241
    %v312 = vpop.f32.mrb[0].mxu0
    %v313 = vadd.f32 %v239, %v312
    %v314 = vpop.f32.mrb[0].mxu0
    %315 = vmatprep.mubr.f32.mxu0 0.0
    %316 = vmatmul.mubr.f32.gmra.mrb[0].mxu0 %v244
    %v317 = vpop.f32.mrb[0].mxu0
    %v318 = vadd.f32 %v239, %v317
    %v319 = vpop.f32.mrb[0].mxu0
    %320 = vdwg.mxu0
    %s321 = scalar_lea.vmem [#allocation2], 64
    %v322 = vld [vmem:[%s321] sm:$0xff]
    %v323 = vld [vmem:[%s321 + $0x8] sm:$0xff]
    %v324 = vld [vmem:[%s321 + $0x10] sm:$0xff]
    %v325 = vld [vmem:[%s321 + $0x18] sm:$0xff]
    %326 = vmatprep.subr.mxu0 0.0
    %327 = vmatpush1.msra.mxu0 %v322
    %328 = vmatprep.subr.mxu0 0.0
    %329 = vmatpush1.msra.mxu0 %v323
    %330 = vmatprep.subr.mxu0 0.0
    %331 = vmatpush1.msra.mxu0 %v324
    %332 = vmatprep.subr.mxu0 0.0
    %333 = vmatpush1.msra.mxu0 %v325
    %334 = vmatprep.subr.mxu0 0.0
    %335 = vmatpush1.msra.mxu0 0.0
    %336 = vmatprep.subr.mxu0 0.0
    %337 = vmatpush1.msra.mxu0 0.0
    %338 = vmatprep.subr.mxu0 0.0
    %339 = vmatpush1.msra.mxu0 0.0
    %340 = vmatprep.subr.mxu0 0.0
    %341 = vmatpush1.msra.mxu0 0.0
    %342 = vmatprep.subr.mxu0 0.0
    %343 = vmatpush1.msra.mxu0 0.0
    %344 = vmatprep.subr.mxu0 0.0
    %345 = vmatpush1.msra.mxu0 0.0
    %346 = vmatprep.subr.mxu0 0.0
    %347 = vmatpush1.msra.mxu0 0.0
    %348 = vmatprep.subr.mxu0 0.0
    %349 = vmatpush1.msra.mxu0 0.0
    %350 = vmatprep.subr.mxu0 0.0
    %351 = vmatpush1.msra.mxu0 0.0
    %352 = vmatprep.subr.mxu0 0.0
    %353 = vmatpush1.msra.mxu0 0.0
    %354 = vmatprep.subr.mxu0 0.0
    %355 = vmatpush1.msra.mxu0 0.0
    %356 = vmatprep.subr.mxu0 0.0
    %357 = vmatpush1.msra.mxu0 0.0
    %358 = vmatprep.subr.mxu0 0.0
    %359 = vmatpush1.msra.mxu0 0.0
    %360 = vmatprep.subr.mxu0 0.0
    %361 = vmatpush1.msra.mxu0 0.0
    %362 = vmatprep.subr.mxu0 0.0
    %363 = vmatpush1.msra.mxu0 0.0
    %364 = vmatprep.subr.mxu0 0.0
    %365 = vmatpush1.msra.mxu0 0.0
    %366 = vmatprep.subr.mxu0 0.0
    %367 = vmatpush1.msra.mxu0 0.0
    %368 = vmatprep.subr.mxu0 0.0
    %369 = vmatpush1.msra.mxu0 0.0
    %370 = vmatprep.subr.mxu0 0.0
    %371 = vmatpush1.msra.mxu0 0.0
    %372 = vmatprep.subr.mxu0 0.0
    %373 = vmatpush1.msra.mxu0 0.0
    %374 = vmatprep.subr.mxu0 0.0
    %375 = vmatpush1.msra.mxu0 0.0
    %376 = vmatprep.subr.mxu0 0.0
    %377 = vmatpush1.msra.mxu0 0.0
    %378 = vmatprep.subr.mxu0 0.0
    %379 = vmatpush1.msra.mxu0 0.0
    %380 = vmatprep.subr.mxu0 0.0
    %381 = vmatpush1.msra.mxu0 0.0
    %382 = vmatprep.subr.mxu0 0.0
    %383 = vmatpush1.msra.mxu0 0.0
    %384 = vmatprep.subr.mxu0 0.0
    %385 = vmatpush1.msra.mxu0 0.0
    %386 = vmatprep.subr.mxu0 0.0
    %387 = vmatpush1.msra.mxu0 0.0
    %388 = vmatprep.subr.mxu0 0.0
    %389 = vmatpush1.msra.mxu0 0.0
    %390 = vmatprep.mubr.f32.mxu0 0.0
    %391 = vmatmul.mubr.f32.gmra.mrb[0].mxu0 %v241
    %v392 = vpop.f32.mrb[0].mxu0
    %v393 = vadd.f32 0.0, %v392
    %v394 = vpop.f32.mrb[0].mxu0
    %395 = vmatprep.mubr.f32.mxu0 0.0
    %396 = vmatmul.mubr.f32.gmra.mrb[0].mxu0 %v244
    %v397 = vpop.f32.mrb[0].mxu0
    %v398 = vadd.f32 0.0, %v397
    %v399 = vpop.f32.mrb[0].mxu0
    %400 = vdwg.mxu0
    %s401 = scalar_lea.vmem [#allocation2], 96
    %v402 = vld [vmem:[%s401] sm:$0xff]
    %v403 = vld [vmem:[%s401 + $0x8] sm:$0xff]
    %v404 = vld [vmem:[%s401 + $0x10] sm:$0xff]
    %v405 = vld [vmem:[%s401 + $0x18] sm:$0xff]
    %406 = vmatprep.subr.mxu0 0.0
    %407 = vmatpush1.msra.mxu0 %v402
    %408 = vmatprep.subr.mxu0 0.0
    %409 = vmatpush1.msra.mxu0 %v403
    %410 = vmatprep.subr.mxu0 0.0
    %411 = vmatpush1.msra.mxu0 %v404
    %412 = vmatprep.subr.mxu0 0.0
    %413 = vmatpush1.msra.mxu0 %v405
    %414 = vmatprep.subr.mxu0 0.0
    %415 = vmatpush1.msra.mxu0 0.0
    %416 = vmatprep.subr.mxu0 0.0
    %417 = vmatpush1.msra.mxu0 0.0
    %418 = vmatprep.subr.mxu0 0.0
    %419 = vmatpush1.msra.mxu0 0.0
    %420 = vmatprep.subr.mxu0 0.0
    %421 = vmatpush1.msra.mxu0 0.0
    %422 = vmatprep.subr.mxu0 0.0
    %423 = vmatpush1.msra.mxu0 0.0
    %424 = vmatprep.subr.mxu0 0.0
    %425 = vmatpush1.msra.mxu0 0.0
    %426 = vmatprep.subr.mxu0 0.0
    %427 = vmatpush1.msra.mxu0 0.0
    %428 = vmatprep.subr.mxu0 0.0
    %429 = vmatpush1.msra.mxu0 0.0
    %430 = vmatprep.subr.mxu0 0.0
    %431 = vmatpush1.msra.mxu0 0.0
    %432 = vmatprep.subr.mxu0 0.0
    %433 = vmatpush1.msra.mxu0 0.0
    %434 = vmatprep.subr.mxu0 0.0
    %435 = vmatpush1.msra.mxu0 0.0
    %436 = vmatprep.subr.mxu0 0.0
    %437 = vmatpush1.msra.mxu0 0.0
    %438 = vmatprep.subr.mxu0 0.0
    %439 = vmatpush1.msra.mxu0 0.0
    %440 = vmatprep.subr.mxu0 0.0
    %441 = vmatpush1.msra.mxu0 0.0
    %442 = vmatprep.subr.mxu0 0.0
    %443 = vmatpush1.msra.mxu0 0.0
    %444 = vmatprep.subr.mxu0 0.0
    %445 = vmatpush1.msra.mxu0 0.0
    %446 = vmatprep.subr.mxu0 0.0
    %447 = vmatpush1.msra.mxu0 0.0
    %448 = vmatprep.subr.mxu0 0.0
    %449 = vmatpush1.msra.mxu0 0.0
    %450 = vmatprep.subr.mxu0 0.0
    %451 = vmatpush1.msra.mxu0 0.0
    %452 = vmatprep.subr.mxu0 0.0
    %453 = vmatpush1.msra.mxu0 0.0
    %454 = vmatprep.subr.mxu0 0.0
    %455 = vmatpush1.msra.mxu0 0.0
    %456 = vmatprep.subr.mxu0 0.0
    %457 = vmatpush1.msra.mxu0 0.0
    %458 = vmatprep.subr.mxu0 0.0
    %459 = vmatpush1.msra.mxu0 0.0
    %460 = vmatprep.subr.mxu0 0.0
    %461 = vmatpush1.msra.mxu0 0.0
    %462 = vmatprep.subr.mxu0 0.0
    %463 = vmatpush1.msra.mxu0 0.0
    %464 = vmatprep.subr.mxu0 0.0
    %465 = vmatpush1.msra.mxu0 0.0
    %466 = vmatprep.subr.mxu0 0.0
    %467 = vmatpush1.msra.mxu0 0.0
    %468 = vmatprep.subr.mxu0 0.0
    %469 = vmatpush1.msra.mxu0 0.0
    %470 = vmatprep.mubr.f32.mxu0 0.0
    %471 = vmatmul.mubr.f32.gmra.mrb[0].mxu0 %v241
    %v472 = vpop.f32.mrb[0].mxu0
    %v473 = vadd.f32 0.0, %v472
    %v474 = vpop.f32.mrb[0].mxu0
    %475 = vmatprep.mubr.f32.mxu0 0.0
    %476 = vmatmul.mubr.f32.gmra.mrb[0].mxu0 %v244
    %v477 = vpop.f32.mrb[0].mxu0
    %v478 = vadd.f32 0.0, %v477
    %v479 = vpop.f32.mrb[0].mxu0
    %480 = vdwg.mxu0
    %v481 = vld [vmem:[%s3] sm:$0xff]
    %v482 = vld [vmem:[%s3 + $0x8] sm:$0xff]
    %v483 = vld [vmem:[%s3 + $0x10] sm:$0xff]
    %v484 = vld [vmem:[%s3 + $0x18] sm:$0xff]
    %v485 = vld [vmem:[%s3 + $0x20] sm:$0xff]
    %v487 = vsel %vm146, %v116, 0
    %v490 = vsel %vm146, %v117, 0
    %v493 = vsel %vm146, %v118, 0
    %v496 = vsel %vm146, %v119, 0
    %v499 = vsel %vm146, %v120, 0
    %501 = vmatprep.subr.mxu0 0.0
    %502 = vmatpush1.msra.mxu0 %v393
    %503 = vmatprep.subr.mxu0 0.0
    %504 = vmatpush1.msra.mxu0 %v398
    %505 = vmatprep.subr.mxu0 0.0
    %506 = vmatpush1.msra.mxu0 %v473
    %507 = vmatprep.subr.mxu0 0.0
    %508 = vmatpush1.msra.mxu0 %v478
    %509 = vmatprep.subr.mxu0 0.0
    %510 = vmatpush1.msra.mxu0 0.0
    %511 = vmatprep.subr.mxu0 0.0
    %512 = vmatpush1.msra.mxu0 0.0
    %513 = vmatprep.subr.mxu0 0.0
    %514 = vmatpush1.msra.mxu0 0.0
    %515 = vmatprep.subr.mxu0 0.0
    %516 = vmatpush1.msra.mxu0 0.0
    %517 = vmatprep.subr.mxu0 0.0
    %518 = vmatpush1.msra.mxu0 0.0
    %519 = vmatprep.subr.mxu0 0.0
    %520 = vmatpush1.msra.mxu0 0.0
    %521 = vmatprep.subr.mxu0 0.0
    %522 = vmatpush1.msra.mxu0 0.0
    %523 = vmatprep.subr.mxu0 0.0
    %524 = vmatpush1.msra.mxu0 0.0
    %525 = vmatprep.subr.mxu0 0.0
    %526 = vmatpush1.msra.mxu0 0.0
    %527 = vmatprep.subr.mxu0 0.0
    %528 = vmatpush1.msra.mxu0 0.0
    %529 = vmatprep.subr.mxu0 0.0
    %530 = vmatpush1.msra.mxu0 0.0
    %531 = vmatprep.subr.mxu0 0.0
    %532 = vmatpush1.msra.mxu0 0.0
    %533 = vmatprep.subr.mxu0 0.0
    %534 = vmatpush1.msra.mxu0 0.0
    %535 = vmatprep.subr.mxu0 0.0
    %536 = vmatpush1.msra.mxu0 0.0
    %537 = vmatprep.subr.mxu0 0.0
    %538 = vmatpush1.msra.mxu0 0.0
    %539 = vmatprep.subr.mxu0 0.0
    %540 = vmatpush1.msra.mxu0 0.0
    %541 = vmatprep.subr.mxu0 0.0
    %542 = vmatpush1.msra.mxu0 0.0
    %543 = vmatprep.subr.mxu0 0.0
    %544 = vmatpush1.msra.mxu0 0.0
    %545 = vmatprep.subr.mxu0 0.0
    %546 = vmatpush1.msra.mxu0 0.0
    %547 = vmatprep.subr.mxu0 0.0
    %548 = vmatpush1.msra.mxu0 0.0
    %549 = vmatprep.subr.mxu0 0.0
    %550 = vmatpush1.msra.mxu0 0.0
    %551 = vmatprep.subr.mxu0 0.0
    %552 = vmatpush1.msra.mxu0 0.0
    %553 = vmatprep.subr.mxu0 0.0
    %554 = vmatpush1.msra.mxu0 0.0
    %555 = vmatprep.subr.mxu0 0.0
    %556 = vmatpush1.msra.mxu0 0.0
    %557 = vmatprep.subr.mxu0 0.0
    %558 = vmatpush1.msra.mxu0 0.0
    %559 = vmatprep.subr.mxu0 0.0
    %560 = vmatpush1.msra.mxu0 0.0
    %561 = vmatprep.subr.mxu0 0.0
    %562 = vmatpush1.msra.mxu0 0.0
    %563 = vmatprep.subr.mxu0 0.0
    %564 = vmatpush1.msra.mxu0 0.0
    %565 = vmatprep.mubr.f32.mxu0 0.0
    %566 = vmatmul.mubr.f32.gmra.mrb[0].mxu0 %v487
    %v567 = vpop.f32.mrb[0].mxu0
    %v568 = vadd.f32 %v481, %v567
    %v569 = vpop.f32.mrb[0].mxu0
    %570 = vmatprep.mubr.f32.mxu0 0.0
    %571 = vmatmul.mubr.f32.gmra.mrb[0].mxu0 %v490
    %v572 = vpop.f32.mrb[0].mxu0
    %v573 = vadd.f32 %v482, %v572
    %v574 = vpop.f32.mrb[0].mxu0
    %575 = vmatprep.mubr.f32.mxu0 0.0
    %576 = vmatmul.mubr.f32.gmra.mrb[0].mxu0 %v493
    %v577 = vpop.f32.mrb[0].mxu0
    %v578 = vadd.f32 %v483, %v577
    %v579 = vpop.f32.mrb[0].mxu0
    %580 = vmatprep.mubr.f32.mxu0 0.0
    %581 = vmatmul.mubr.f32.gmra.mrb[0].mxu0 %v496
    %v582 = vpop.f32.mrb[0].mxu0
    %v583 = vadd.f32 %v484, %v582
    %v584 = vpop.f32.mrb[0].mxu0
    %585 = vmatprep.mubr.f32.mxu0 0.0
    %586 = vmatmul.mubr.f32.gmra.mrb[0].mxu0 %v499
    %v587 = vpop.f32.mrb[0].mxu0
    %v588 = vadd.f32 %v485, %v587
    %v589 = vpop.f32.mrb[0].mxu0
    %590 = vdwg.mxu0
    %v591 = vmax.f32 %v568, 0.0
    %v592 = vmax.f32 %v573, 0.0
    %v593 = vmax.f32 %v578, 0.0
    %v594 = vmax.f32 %v583, 0.0
    %v595 = vmax.f32 %v588, 0.0
    %s596 = scalar_lea.vmem [#allocation2], 128
    %v597 = vld [vmem:[%s596] sm:$0xff]
    %v598 = vld [vmem:[%s596 + $0x8] sm:$0xff]
    %v599 = vld [vmem:[%s596 + $0x10] sm:$0xff]
    %v600 = vld [vmem:[%s596 + $0x18] sm:$0xff]
    %v601 = vld [vmem:[%s5 + $0x2] sm:$0x1]
    %v602 = vlaneseq
    %v603 = vshrl.u32 %v602, 7
    %v604 = vsub.s32 0, %v603
    %v605 = vrot.slane %v601, %v604
    %v607 = vsel %vm146, %v591, 0
    %v610 = vsel %vm146, %v592, 0
    %v613 = vsel %vm146, %v593, 0
    %v616 = vsel %vm146, %v594, 0
    %v619 = vsel %vm146, %v595, 0
    %621 = vmatprep.subr.mxu0 0.0
    %622 = vmatpush1.msra.mxu0 %v597
    %623 = vmatprep.subr.mxu0 0.0
    %624 = vmatpush1.msra.mxu0 %v598
    %625 = vmatprep.subr.mxu0 0.0
    %626 = vmatpush1.msra.mxu0 %v599
    %627 = vmatprep.subr.mxu0 0.0
    %628 = vmatpush1.msra.mxu0 %v600
    %629 = vmatprep.subr.mxu0 0.0
    %630 = vmatpush1.msra.mxu0 0.0
    %631 = vmatprep.subr.mxu0 0.0
    %632 = vmatpush1.msra.mxu0 0.0
    %633 = vmatprep.subr.mxu0 0.0
    %634 = vmatpush1.msra.mxu0 0.0
    %635 = vmatprep.subr.mxu0 0.0
    %636 = vmatpush1.msra.mxu0 0.0
    %637 = vmatprep.subr.mxu0 0.0
    %638 = vmatpush1.msra.mxu0 0.0
    %639 = vmatprep.subr.mxu0 0.0
    %640 = vmatpush1.msra.mxu0 0.0
    %641 = vmatprep.subr.mxu0 0.0
    %642 = vmatpush1.msra.mxu0 0.0
    %643 = vmatprep.subr.mxu0 0.0
    %644 = vmatpush1.msra.mxu0 0.0
    %645 = vmatprep.subr.mxu0 0.0
    %646 = vmatpush1.msra.mxu0 0.0
    %647 = vmatprep.subr.mxu0 0.0
    %648 = vmatpush1.msra.mxu0 0.0
    %649 = vmatprep.subr.mxu0 0.0
    %650 = vmatpush1.msra.mxu0 0.0
    %651 = vmatprep.subr.mxu0 0.0
    %652 = vmatpush1.msra.mxu0 0.0
    %653 = vmatprep.subr.mxu0 0.0
    %654 = vmatpush1.msra.mxu0 0.0
    %655 = vmatprep.subr.mxu0 0.0
    %656 = vmatpush1.msra.mxu0 0.0
    %657 = vmatprep.subr.mxu0 0.0
    %658 = vmatpush1.msra.mxu0 0.0
    %659 = vmatprep.subr.mxu0 0.0
    %660 = vmatpush1.msra.mxu0 0.0
    %661 = vmatprep.subr.mxu0 0.0
    %662 = vmatpush1.msra.mxu0 0.0
    %663 = vmatprep.subr.mxu0 0.0
    %664 = vmatpush1.msra.mxu0 0.0
    %665 = vmatprep.subr.mxu0 0.0
    %666 = vmatpush1.msra.mxu0 0.0
    %667 = vmatprep.subr.mxu0 0.0
    %668 = vmatpush1.msra.mxu0 0.0
    %669 = vmatprep.subr.mxu0 0.0
    %670 = vmatpush1.msra.mxu0 0.0
    %671 = vmatprep.subr.mxu0 0.0
    %672 = vmatpush1.msra.mxu0 0.0
    %673 = vmatprep.subr.mxu0 0.0
    %674 = vmatpush1.msra.mxu0 0.0
    %675 = vmatprep.subr.mxu0 0.0
    %676 = vmatpush1.msra.mxu0 0.0
    %677 = vmatprep.subr.mxu0 0.0
    %678 = vmatpush1.msra.mxu0 0.0
    %679 = vmatprep.subr.mxu0 0.0
    %680 = vmatpush1.msra.mxu0 0.0
    %681 = vmatprep.subr.mxu0 0.0
    %682 = vmatpush1.msra.mxu0 0.0
    %683 = vmatprep.subr.mxu0 0.0
    %684 = vmatpush1.msra.mxu0 0.0
    %685 = vmatprep.mubr.f32.mxu0 0.0
    %686 = vmatmul.mubr.f32.gmra.mrb[0].mxu0 %v607
    %v687 = vpop.f32.mrb[0].mxu0
    %v688 = vadd.f32 %v605, %v687
    %v689 = vpop.f32.mrb[0].mxu0
    %690 = vmatprep.mubr.f32.mxu0 0.0
    %691 = vmatmul.mubr.f32.gmra.mrb[0].mxu0 %v610
    %v692 = vpop.f32.mrb[0].mxu0
    %v693 = vadd.f32 %v605, %v692
    %v694 = vpop.f32.mrb[0].mxu0
    %695 = vmatprep.mubr.f32.mxu0 0.0
    %696 = vmatmul.mubr.f32.gmra.mrb[0].mxu0 %v613
    %v697 = vpop.f32.mrb[0].mxu0
    %v698 = vadd.f32 %v605, %v697
    %v699 = vpop.f32.mrb[0].mxu0
    %700 = vmatprep.mubr.f32.mxu0 0.0
    %701 = vmatmul.mubr.f32.gmra.mrb[0].mxu0 %v616
    %v702 = vpop.f32.mrb[0].mxu0
    %v703 = vadd.f32 %v605, %v702
    %v704 = vpop.f32.mrb[0].mxu0
    %705 = vmatprep.mubr.f32.mxu0 0.0
    %706 = vmatmul.mubr.f32.gmra.mrb[0].mxu0 %v619
    %v707 = vpop.f32.mrb[0].mxu0
    %v708 = vadd.f32 %v605, %v707
    %v709 = vpop.f32.mrb[0].mxu0
    %710 = vdwg.mxu0
    %vm711 = vcmask 326656
    %v713 = vsel %vm711, %v133, 0
    %v716 = vsel %vm711, %v134, 0
    %718 = vmatprep.subr.mxu0 0.0
    %719 = vmatpush1.msra.mxu0 %v688
    %720 = vmatprep.subr.mxu0 0.0
    %721 = vmatpush1.msra.mxu0 %v693
    %722 = vmatprep.subr.mxu0 0.0
    %723 = vmatpush1.msra.mxu0 %v698
    %724 = vmatprep.subr.mxu0 0.0
    %725 = vmatpush1.msra.mxu0 %v703
    %726 = vmatprep.subr.mxu0 0.0
    %727 = vmatpush1.msra.mxu0 %v708
    %728 = vmatprep.subr.mxu0 0.0
    %729 = vmatpush1.msra.mxu0 0.0
    %730 = vmatprep.subr.mxu0 0.0
    %731 = vmatpush1.msra.mxu0 0.0
    %732 = vmatprep.subr.mxu0 0.0
    %733 = vmatpush1.msra.mxu0 0.0
    %734 = vmatprep.subr.mxu0 0.0
    %735 = vmatpush1.msra.mxu0 0.0
    %736 = vmatprep.subr.mxu0 0.0
    %737 = vmatpush1.msra.mxu0 0.0
    %738 = vmatprep.subr.mxu0 0.0
    %739 = vmatpush1.msra.mxu0 0.0
    %740 = vmatprep.subr.mxu0 0.0
    %741 = vmatpush1.msra.mxu0 0.0
    %742 = vmatprep.subr.mxu0 0.0
    %743 = vmatpush1.msra.mxu0 0.0
    %744 = vmatprep.subr.mxu0 0.0
    %745 = vmatpush1.msra.mxu0 0.0
    %746 = vmatprep.subr.mxu0 0.0
    %747 = vmatpush1.msra.mxu0 0.0
    %748 = vmatprep.subr.mxu0 0.0
    %749 = vmatpush1.msra.mxu0 0.0
    %750 = vmatprep.subr.mxu0 0.0
    %751 = vmatpush1.msra.mxu0 0.0
    %752 = vmatprep.subr.mxu0 0.0
    %753 = vmatpush1.msra.mxu0 0.0
    %754 = vmatprep.subr.mxu0 0.0
    %755 = vmatpush1.msra.mxu0 0.0
    %756 = vmatprep.subr.mxu0 0.0
    %757 = vmatpush1.msra.mxu0 0.0
    %758 = vmatprep.subr.mxu0 0.0
    %759 = vmatpush1.msra.mxu0 0.0
    %760 = vmatprep.subr.mxu0 0.0
    %761 = vmatpush1.msra.mxu0 0.0
    %762 = vmatprep.subr.mxu0 0.0
    %763 = vmatpush1.msra.mxu0 0.0
    %764 = vmatprep.subr.mxu0 0.0
    %765 = vmatpush1.msra.mxu0 0.0
    %766 = vmatprep.subr.mxu0 0.0
    %767 = vmatpush1.msra.mxu0 0.0
    %768 = vmatprep.subr.mxu0 0.0
    %769 = vmatpush1.msra.mxu0 0.0
    %770 = vmatprep.subr.mxu0 0.0
    %771 = vmatpush1.msra.mxu0 0.0
    %772 = vmatprep.subr.mxu0 0.0
    %773 = vmatpush1.msra.mxu0 0.0
    %774 = vmatprep.subr.mxu0 0.0
    %775 = vmatpush1.msra.mxu0 0.0
    %776 = vmatprep.subr.mxu0 0.0
    %777 = vmatpush1.msra.mxu0 0.0
    %778 = vmatprep.subr.mxu0 0.0
    %779 = vmatpush1.msra.mxu0 0.0
    %780 = vmatprep.subr.mxu0 0.0
    %781 = vmatpush1.msra.mxu0 0.0
    %782 = vmatprep.mubr.f32.mxu0 0.0
    %783 = vmatmul.mubr.f32.gmra.mrb[0].mxu0 %v713
    %v784 = vpop.f32.mrb[0].mxu0
    %v785 = vadd.f32 %v313, %v784
    %v786 = vpop.f32.mrb[0].mxu0
    %787 = vmatprep.mubr.f32.mxu0 0.0
    %788 = vmatmul.mubr.f32.gmra.mrb[0].mxu0 %v716
    %v789 = vpop.f32.mrb[0].mxu0
    %v790 = vadd.f32 %v318, %v789
    %v791 = vpop.f32.mrb[0].mxu0
    %792 = vdwg.mxu0
    %v793 = vld [vmem:[%s5 + $0x3] sm:$0x1]
    %v794 = vlaneseq
    %v795 = vshrl.u32 %v794, 7
    %v796 = vsub.s32 0, %v795
    %v797 = vrot.slane %v793, %v796
    %v798 = vmul.f32 %v785, %v797
    %v799 = vmul.f32 %v790, %v797
    %v800 = vld [vmem:[%s5 + $0x4] sm:$0x1]
    %v801 = vlaneseq
    %v802 = vshrl.u32 %v801, 7
    %v803 = vsub.s32 0, %v802
    %v804 = vrot.slane %v800, %v803
    %v805 = vadd.f32 %v798, %v804
    %v806 = vadd.f32 %v799, %v804
    %v807 = vmax.f32 %v805, 0.0
    %v808 = vmax.f32 %v806, 0.0
    %s809 = scalar_lea.vmem [#allocation2], 160
    %v810 = vld [vmem:[%s809] sm:$0xff]
    %v811 = vld [vmem:[%s809 + $0x8] sm:$0xff]
    %v812 = vld [vmem:[%s809 + $0x10] sm:$0xff]
    %v813 = vld [vmem:[%s809 + $0x18] sm:$0xff]
    %v814 = vld [vmem:[%s5 + $0x5] sm:$0x1]
    %v815 = vlaneseq
    %v816 = vshrl.u32 %v815, 7
    %v817 = vsub.s32 0, %v816
    %v818 = vrot.slane %v814, %v817
    %v820 = vsel %vm146, %v807, 0
    %v823 = vsel %vm146, %v808, 0
    %825 = vmatprep.subr.mxu0 0.0
    %826 = vmatpush1.msra.mxu0 %v810
    %827 = vmatprep.subr.mxu0 0.0
    %828 = vmatpush1.msra.mxu0 %v811
    %829 = vmatprep.subr.mxu0 0.0
    %830 = vmatpush1.msra.mxu0 %v812
    %831 = vmatprep.subr.mxu0 0.0
    %832 = vmatpush1.msra.mxu0 %v813
    %833 = vmatprep.subr.mxu0 0.0
    %834 = vmatpush1.msra.mxu0 0.0
    %835 = vmatprep.subr.mxu0 0.0
    %836 = vmatpush1.msra.mxu0 0.0
    %837 = vmatprep.subr.mxu0 0.0
    %838 = vmatpush1.msra.mxu0 0.0
    %839 = vmatprep.subr.mxu0 0.0
    %840 = vmatpush1.msra.mxu0 0.0
    %841 = vmatprep.subr.mxu0 0.0
    %842 = vmatpush1.msra.mxu0 0.0
    %843 = vmatprep.subr.mxu0 0.0
    %844 = vmatpush1.msra.mxu0 0.0
    %845 = vmatprep.subr.mxu0 0.0
    %846 = vmatpush1.msra.mxu0 0.0
    %847 = vmatprep.subr.mxu0 0.0
    %848 = vmatpush1.msra.mxu0 0.0
    %849 = vmatprep.subr.mxu0 0.0
    %850 = vmatpush1.msra.mxu0 0.0
    %851 = vmatprep.subr.mxu0 0.0
    %852 = vmatpush1.msra.mxu0 0.0
    %853 = vmatprep.subr.mxu0 0.0
    %854 = vmatpush1.msra.mxu0 0.0
    %855 = vmatprep.subr.mxu0 0.0
    %856 = vmatpush1.msra.mxu0 0.0
    %857 = vmatprep.subr.mxu0 0.0
    %858 = vmatpush1.msra.mxu0 0.0
    %859 = vmatprep.subr.mxu0 0.0
    %860 = vmatpush1.msra.mxu0 0.0
    %861 = vmatprep.subr.mxu0 0.0
    %862 = vmatpush1.msra.mxu0 0.0
    %863 = vmatprep.subr.mxu0 0.0
    %864 = vmatpush1.msra.mxu0 0.0
    %865 = vmatprep.subr.mxu0 0.0
    %866 = vmatpush1.msra.mxu0 0.0
    %867 = vmatprep.subr.mxu0 0.0
    %868 = vmatpush1.msra.mxu0 0.0
    %869 = vmatprep.subr.mxu0 0.0
    %870 = vmatpush1.msra.mxu0 0.0
    %871 = vmatprep.subr.mxu0 0.0
    %872 = vmatpush1.msra.mxu0 0.0
    %873 = vmatprep.subr.mxu0 0.0
    %874 = vmatpush1.msra.mxu0 0.0
    %875 = vmatprep.subr.mxu0 0.0
    %876 = vmatpush1.msra.mxu0 0.0
    %877 = vmatprep.subr.mxu0 0.0
    %878 = vmatpush1.msra.mxu0 0.0
    %879 = vmatprep.subr.mxu0 0.0
    %880 = vmatpush1.msra.mxu0 0.0
    %881 = vmatprep.subr.mxu0 0.0
    %882 = vmatpush1.msra.mxu0 0.0
    %883 = vmatprep.subr.mxu0 0.0
    %884 = vmatpush1.msra.mxu0 0.0
    %885 = vmatprep.subr.mxu0 0.0
    %886 = vmatpush1.msra.mxu0 0.0
    %887 = vmatprep.subr.mxu0 0.0
    %888 = vmatpush1.msra.mxu0 0.0
    %889 = vmatprep.mubr.f32.mxu0 0.0
    %890 = vmatmul.mubr.f32.gmra.mrb[0].mxu0 %v820
    %v891 = vpop.f32.mrb[0].mxu0
    %v892 = vadd.f32 %v818, %v891
    %v893 = vpop.f32.mrb[0].mxu0
    %894 = vmatprep.mubr.f32.mxu0 0.0
    %895 = vmatmul.mubr.f32.gmra.mrb[0].mxu0 %v823
    %v896 = vpop.f32.mrb[0].mxu0
    %v897 = vadd.f32 %v818, %v896
    %v898 = vpop.f32.mrb[0].mxu0
    %899 = vdwg.mxu0
    %v900 = vmax.f32 %v892, 0.0
    %v901 = vmax.f32 %v897, 0.0
    %s902 = scalar_lea.vmem [#allocation2], 192
    %v903 = vld [vmem:[%s902] sm:$0xff]
    %v904 = vld [vmem:[%s902 + $0x8] sm:$0xff]
    %v905 = vld [vmem:[%s902 + $0x10] sm:$0xff]
    %v906 = vld [vmem:[%s902 + $0x18] sm:$0xff]
    %v907 = vld [vmem:[%s5 + $0x6] sm:$0x1]
    %v908 = vlaneseq
    %v909 = vshrl.u32 %v908, 7
    %v910 = vsub.s32 0, %v909
    %v911 = vrot.slane %v907, %v910
    %v913 = vsel %vm146, %v900, 0
    %v916 = vsel %vm146, %v901, 0
    %918 = vmatprep.subr.mxu0 0.0
    %919 = vmatpush1.msra.mxu0 %v903
    %920 = vmatprep.subr.mxu0 0.0
    %921 = vmatpush1.msra.mxu0 %v904
    %922 = vmatprep.subr.mxu0 0.0
    %923 = vmatpush1.msra.mxu0 %v905
    %924 = vmatprep.subr.mxu0 0.0
    %925 = vmatpush1.msra.mxu0 %v906
    %926 = vmatprep.subr.mxu0 0.0
    %927 = vmatpush1.msra.mxu0 0.0
    %928 = vmatprep.subr.mxu0 0.0
    %929 = vmatpush1.msra.mxu0 0.0
    %930 = vmatprep.subr.mxu0 0.0
    %931 = vmatpush1.msra.mxu0 0.0
    %932 = vmatprep.subr.mxu0 0.0
    %933 = vmatpush1.msra.mxu0 0.0
    %934 = vmatprep.subr.mxu0 0.0
    %935 = vmatpush1.msra.mxu0 0.0
    %936 = vmatprep.subr.mxu0 0.0
    %937 = vmatpush1.msra.mxu0 0.0
    %938 = vmatprep.subr.mxu0 0.0
    %939 = vmatpush1.msra.mxu0 0.0
    %940 = vmatprep.subr.mxu0 0.0
    %941 = vmatpush1.msra.mxu0 0.0
    %942 = vmatprep.subr.mxu0 0.0
    %943 = vmatpush1.msra.mxu0 0.0
    %944 = vmatprep.subr.mxu0 0.0
    %945 = vmatpush1.msra.mxu0 0.0
    %946 = vmatprep.subr.mxu0 0.0
    %947 = vmatpush1.msra.mxu0 0.0
    %948 = vmatprep.subr.mxu0 0.0
    %949 = vmatpush1.msra.mxu0 0.0
    %950 = vmatprep.subr.mxu0 0.0
    %951 = vmatpush1.msra.mxu0 0.0
    %952 = vmatprep.subr.mxu0 0.0
    %953 = vmatpush1.msra.mxu0 0.0
    %954 = vmatprep.subr.mxu0 0.0
    %955 = vmatpush1.msra.mxu0 0.0
    %956 = vmatprep.subr.mxu0 0.0
    %957 = vmatpush1.msra.mxu0 0.0
    %958 = vmatprep.subr.mxu0 0.0
    %959 = vmatpush1.msra.mxu0 0.0
    %960 = vmatprep.subr.mxu0 0.0
    %961 = vmatpush1.msra.mxu0 0.0
    %962 = vmatprep.subr.mxu0 0.0
    %963 = vmatpush1.msra.mxu0 0.0
    %964 = vmatprep.subr.mxu0 0.0
    %965 = vmatpush1.msra.mxu0 0.0
    %966 = vmatprep.subr.mxu0 0.0
    %967 = vmatpush1.msra.mxu0 0.0
    %968 = vmatprep.subr.mxu0 0.0
    %969 = vmatpush1.msra.mxu0 0.0
    %970 = vmatprep.subr.mxu0 0.0
    %971 = vmatpush1.msra.mxu0 0.0
    %972 = vmatprep.subr.mxu0 0.0
    %973 = vmatpush1.msra.mxu0 0.0
    %974 = vmatprep.subr.mxu0 0.0
    %975 = vmatpush1.msra.mxu0 0.0
    %976 = vmatprep.subr.mxu0 0.0
    %977 = vmatpush1.msra.mxu0 0.0
    %978 = vmatprep.subr.mxu0 0.0
    %979 = vmatpush1.msra.mxu0 0.0
    %980 = vmatprep.subr.mxu0 0.0
    %981 = vmatpush1.msra.mxu0 0.0
    %982 = vmatprep.mubr.f32.mxu0 0.0
    %983 = vmatmul.mubr.f32.gmra.mrb[0].mxu0 %v913
    %v984 = vpop.f32.mrb[0].mxu0
    %v985 = vadd.f32 %v911, %v984
    %v986 = vpop.f32.mrb[0].mxu0
    %987 = vmatprep.mubr.f32.mxu0 0.0
    %988 = vmatmul.mubr.f32.gmra.mrb[0].mxu0 %v916
    %v989 = vpop.f32.mrb[0].mxu0
    %v990 = vadd.f32 %v911, %v989
    %v991 = vpop.f32.mrb[0].mxu0
    %992 = vdwg.mxu0
    %s993 = scalar_lea.vmem [#allocation2], 224
    %v994 = vld [vmem:[%s993] sm:$0xff]
    %v995 = vld [vmem:[%s993 + $0x8] sm:$0xff]
    %v996 = vld [vmem:[%s993 + $0x10] sm:$0xff]
    %v997 = vld [vmem:[%s993 + $0x18] sm:$0xff]
    %998 = vmatprep.subr.mxu0 0.0
    %999 = vmatpush1.msra.mxu0 %v994
    %1000 = vmatprep.subr.mxu0 0.0
    %1001 = vmatpush1.msra.mxu0 %v995
    %1002 = vmatprep.subr.mxu0 0.0
    %1003 = vmatpush1.msra.mxu0 %v996
    %1004 = vmatprep.subr.mxu0 0.0
    %1005 = vmatpush1.msra.mxu0 %v997
    %1006 = vmatprep.subr.mxu0 0.0
    %1007 = vmatpush1.msra.mxu0 0.0
    %1008 = vmatprep.subr.mxu0 0.0
    %1009 = vmatpush1.msra.mxu0 0.0
    %1010 = vmatprep.subr.mxu0 0.0
    %1011 = vmatpush1.msra.mxu0 0.0
    %1012 = vmatprep.subr.mxu0 0.0
    %1013 = vmatpush1.msra.mxu0 0.0
    %1014 = vmatprep.subr.mxu0 0.0
    %1015 = vmatpush1.msra.mxu0 0.0
    %1016 = vmatprep.subr.mxu0 0.0
    %1017 = vmatpush1.msra.mxu0 0.0
    %1018 = vmatprep.subr.mxu0 0.0
    %1019 = vmatpush1.msra.mxu0 0.0
    %1020 = vmatprep.subr.mxu0 0.0
    %1021 = vmatpush1.msra.mxu0 0.0
    %1022 = vmatprep.subr.mxu0 0.0
    %1023 = vmatpush1.msra.mxu0 0.0
    %1024 = vmatprep.subr.mxu0 0.0
    %1025 = vmatpush1.msra.mxu0 0.0
    %1026 = vmatprep.subr.mxu0 0.0
    %1027 = vmatpush1.msra.mxu0 0.0
    %1028 = vmatprep.subr.mxu0 0.0
    %1029 = vmatpush1.msra.mxu0 0.0
    %1030 = vmatprep.subr.mxu0 0.0
    %1031 = vmatpush1.msra.mxu0 0.0
    %1032 = vmatprep.subr.mxu0 0.0
    %1033 = vmatpush1.msra.mxu0 0.0
    %1034 = vmatprep.subr.mxu0 0.0
    %1035 = vmatpush1.msra.mxu0 0.0
    %1036 = vmatprep.subr.mxu0 0.0
    %1037 = vmatpush1.msra.mxu0 0.0
    %1038 = vmatprep.subr.mxu0 0.0
    %1039 = vmatpush1.msra.mxu0 0.0
    %1040 = vmatprep.subr.mxu0 0.0
    %1041 = vmatpush1.msra.mxu0 0.0
    %1042 = vmatprep.subr.mxu0 0.0
    %1043 = vmatpush1.msra.mxu0 0.0
    %1044 = vmatprep.subr.mxu0 0.0
    %1045 = vmatpush1.msra.mxu0 0.0
    %1046 = vmatprep.subr.mxu0 0.0
    %1047 = vmatpush1.msra.mxu0 0.0
    %1048 = vmatprep.subr.mxu0 0.0
    %1049 = vmatpush1.msra.mxu0 0.0
    %1050 = vmatprep.subr.mxu0 0.0
    %1051 = vmatpush1.msra.mxu0 0.0
    %1052 = vmatprep.subr.mxu0 0.0
    %1053 = vmatpush1.msra.mxu0 0.0
    %1054 = vmatprep.subr.mxu0 0.0
    %1055 = vmatpush1.msra.mxu0 0.0
    %1056 = vmatprep.subr.mxu0 0.0
    %1057 = vmatpush1.msra.mxu0 0.0
    %1058 = vmatprep.subr.mxu0 0.0
    %1059 = vmatpush1.msra.mxu0 0.0
    %1060 = vmatprep.subr.mxu0 0.0
    %1061 = vmatpush1.msra.mxu0 0.0
    %1062 = vmatprep.mubr.f32.mxu0 0.0
    %1063 = vmatmul.mubr.f32.gmra.mrb[0].mxu0 %v913
    %v1064 = vpop.f32.mrb[0].mxu0
    %v1065 = vadd.f32 0.0, %v1064
    %v1066 = vpop.f32.mrb[0].mxu0
    %1067 = vmatprep.mubr.f32.mxu0 0.0
    %1068 = vmatmul.mubr.f32.gmra.mrb[0].mxu0 %v916
    %v1069 = vpop.f32.mrb[0].mxu0
    %v1070 = vadd.f32 0.0, %v1069
    %v1071 = vpop.f32.mrb[0].mxu0
    %1072 = vdwg.mxu0
    %s1073 = scalar_lea.vmem [#allocation2], 256
    %v1074 = vld [vmem:[%s1073] sm:$0xff]
    %v1075 = vld [vmem:[%s1073 + $0x8] sm:$0xff]
    %v1076 = vld [vmem:[%s1073 + $0x10] sm:$0xff]
    %v1077 = vld [vmem:[%s1073 + $0x18] sm:$0xff]
    %1078 = vmatprep.subr.mxu0 0.0
    %1079 = vmatpush1.msra.mxu0 %v1074
    %1080 = vmatprep.subr.mxu0 0.0
    %1081 = vmatpush1.msra.mxu0 %v1075
    %1082 = vmatprep.subr.mxu0 0.0
    %1083 = vmatpush1.msra.mxu0 %v1076
    %1084 = vmatprep.subr.mxu0 0.0
    %1085 = vmatpush1.msra.mxu0 %v1077
    %1086 = vmatprep.subr.mxu0 0.0
    %1087 = vmatpush1.msra.mxu0 0.0
    %1088 = vmatprep.subr.mxu0 0.0
    %1089 = vmatpush1.msra.mxu0 0.0
    %1090 = vmatprep.subr.mxu0 0.0
    %1091 = vmatpush1.msra.mxu0 0.0
    %1092 = vmatprep.subr.mxu0 0.0
    %1093 = vmatpush1.msra.mxu0 0.0
    %1094 = vmatprep.subr.mxu0 0.0
    %1095 = vmatpush1.msra.mxu0 0.0
    %1096 = vmatprep.subr.mxu0 0.0
    %1097 = vmatpush1.msra.mxu0 0.0
    %1098 = vmatprep.subr.mxu0 0.0
    %1099 = vmatpush1.msra.mxu0 0.0
    %1100 = vmatprep.subr.mxu0 0.0
    %1101 = vmatpush1.msra.mxu0 0.0
    %1102 = vmatprep.subr.mxu0 0.0
    %1103 = vmatpush1.msra.mxu0 0.0
    %1104 = vmatprep.subr.mxu0 0.0
    %1105 = vmatpush1.msra.mxu0 0.0
    %1106 = vmatprep.subr.mxu0 0.0
    %1107 = vmatpush1.msra.mxu0 0.0
    %1108 = vmatprep.subr.mxu0 0.0
    %1109 = vmatpush1.msra.mxu0 0.0
    %1110 = vmatprep.subr.mxu0 0.0
    %1111 = vmatpush1.msra.mxu0 0.0
    %1112 = vmatprep.subr.mxu0 0.0
    %1113 = vmatpush1.msra.mxu0 0.0
    %1114 = vmatprep.subr.mxu0 0.0
    %1115 = vmatpush1.msra.mxu0 0.0
    %1116 = vmatprep.subr.mxu0 0.0
    %1117 = vmatpush1.msra.mxu0 0.0
    %1118 = vmatprep.subr.mxu0 0.0
    %1119 = vmatpush1.msra.mxu0 0.0
    %1120 = vmatprep.subr.mxu0 0.0
    %1121 = vmatpush1.msra.mxu0 0.0
    %1122 = vmatprep.subr.mxu0 0.0
    %1123 = vmatpush1.msra.mxu0 0.0
    %1124 = vmatprep.subr.mxu0 0.0
    %1125 = vmatpush1.msra.mxu0 0.0
    %1126 = vmatprep.subr.mxu0 0.0
    %1127 = vmatpush1.msra.mxu0 0.0
    %1128 = vmatprep.subr.mxu0 0.0
    %1129 = vmatpush1.msra.mxu0 0.0
    %1130 = vmatprep.subr.mxu0 0.0
    %1131 = vmatpush1.msra.mxu0 0.0
    %1132 = vmatprep.subr.mxu0 0.0
    %1133 = vmatpush1.msra.mxu0 0.0
    %1134 = vmatprep.subr.mxu0 0.0
    %1135 = vmatpush1.msra.mxu0 0.0
    %1136 = vmatprep.subr.mxu0 0.0
    %1137 = vmatpush1.msra.mxu0 0.0
    %1138 = vmatprep.subr.mxu0 0.0
    %1139 = vmatpush1.msra.mxu0 0.0
    %1140 = vmatprep.subr.mxu0 0.0
    %1141 = vmatpush1.msra.mxu0 0.0
    %1142 = vmatprep.mubr.f32.mxu0 0.0
    %1143 = vmatmul.mubr.f32.gmra.mrb[0].mxu0 %v913
    %v1144 = vpop.f32.mrb[0].mxu0
    %v1145 = vadd.f32 0.0, %v1144
    %v1146 = vpop.f32.mrb[0].mxu0
    %1147 = vmatprep.mubr.f32.mxu0 0.0
    %1148 = vmatmul.mubr.f32.gmra.mrb[0].mxu0 %v916
    %v1149 = vpop.f32.mrb[0].mxu0
    %v1150 = vadd.f32 0.0, %v1149
    %v1151 = vpop.f32.mrb[0].mxu0
    %1152 = vdwg.mxu0
    %s1153 = scalar_lea.vmem %s3, 40
    %v1154 = vld [vmem:[%s1153] sm:$0xff]
    %v1155 = vld [vmem:[%s1153 + $0x8] sm:$0xff]
    %v1156 = vld [vmem:[%s1153 + $0x10] sm:$0xff]
    %v1157 = vld [vmem:[%s1153 + $0x18] sm:$0xff]
    %v1158 = vld [vmem:[%s1153 + $0x20] sm:$0xff]
    %1159 = vmatprep.subr.mxu0 0.0
    %1160 = vmatpush1.msra.mxu0 %v1065
    %1161 = vmatprep.subr.mxu0 0.0
    %1162 = vmatpush1.msra.mxu0 %v1070
    %1163 = vmatprep.subr.mxu0 0.0
    %1164 = vmatpush1.msra.mxu0 %v1145
    %1165 = vmatprep.subr.mxu0 0.0
    %1166 = vmatpush1.msra.mxu0 %v1150
    %1167 = vmatprep.subr.mxu0 0.0
    %1168 = vmatpush1.msra.mxu0 0.0
    %1169 = vmatprep.subr.mxu0 0.0
    %1170 = vmatpush1.msra.mxu0 0.0
    %1171 = vmatprep.subr.mxu0 0.0
    %1172 = vmatpush1.msra.mxu0 0.0
    %1173 = vmatprep.subr.mxu0 0.0
    %1174 = vmatpush1.msra.mxu0 0.0
    %1175 = vmatprep.subr.mxu0 0.0
    %1176 = vmatpush1.msra.mxu0 0.0
    %1177 = vmatprep.subr.mxu0 0.0
    %1178 = vmatpush1.msra.mxu0 0.0
    %1179 = vmatprep.subr.mxu0 0.0
    %1180 = vmatpush1.msra.mxu0 0.0
    %1181 = vmatprep.subr.mxu0 0.0
    %1182 = vmatpush1.msra.mxu0 0.0
    %1183 = vmatprep.subr.mxu0 0.0
    %1184 = vmatpush1.msra.mxu0 0.0
    %1185 = vmatprep.subr.mxu0 0.0
    %1186 = vmatpush1.msra.mxu0 0.0
    %1187 = vmatprep.subr.mxu0 0.0
    %1188 = vmatpush1.msra.mxu0 0.0
    %1189 = vmatprep.subr.mxu0 0.0
    %1190 = vmatpush1.msra.mxu0 0.0
    %1191 = vmatprep.subr.mxu0 0.0
    %1192 = vmatpush1.msra.mxu0 0.0
    %1193 = vmatprep.subr.mxu0 0.0
    %1194 = vmatpush1.msra.mxu0 0.0
    %1195 = vmatprep.subr.mxu0 0.0
    %1196 = vmatpush1.msra.mxu0 0.0
    %1197 = vmatprep.subr.mxu0 0.0
    %1198 = vmatpush1.msra.mxu0 0.0
    %1199 = vmatprep.subr.mxu0 0.0
    %1200 = vmatpush1.msra.mxu0 0.0
    %1201 = vmatprep.subr.mxu0 0.0
    %1202 = vmatpush1.msra.mxu0 0.0
    %1203 = vmatprep.subr.mxu0 0.0
    %1204 = vmatpush1.msra.mxu0 0.0
    %1205 = vmatprep.subr.mxu0 0.0
    %1206 = vmatpush1.msra.mxu0 0.0
    %1207 = vmatprep.subr.mxu0 0.0
    %1208 = vmatpush1.msra.mxu0 0.0
    %1209 = vmatprep.subr.mxu0 0.0
    %1210 = vmatpush1.msra.mxu0 0.0
    %1211 = vmatprep.subr.mxu0 0.0
    %1212 = vmatpush1.msra.mxu0 0.0
    %1213 = vmatprep.subr.mxu0 0.0
    %1214 = vmatpush1.msra.mxu0 0.0
    %1215 = vmatprep.subr.mxu0 0.0
    %1216 = vmatpush1.msra.mxu0 0.0
    %1217 = vmatprep.subr.mxu0 0.0
    %1218 = vmatpush1.msra.mxu0 0.0
    %1219 = vmatprep.subr.mxu0 0.0
    %1220 = vmatpush1.msra.mxu0 0.0
    %1221 = vmatprep.subr.mxu0 0.0
    %1222 = vmatpush1.msra.mxu0 0.0
    %1223 = vmatprep.mubr.f32.mxu0 0.0
    %1224 = vmatmul.mubr.f32.gmra.mrb[0].mxu0 %v487
    %v1225 = vpop.f32.mrb[0].mxu0
    %v1226 = vadd.f32 %v1154, %v1225
    %v1227 = vpop.f32.mrb[0].mxu0
    %1228 = vmatprep.mubr.f32.mxu0 0.0
    %1229 = vmatmul.mubr.f32.gmra.mrb[0].mxu0 %v490
    %v1230 = vpop.f32.mrb[0].mxu0
    %v1231 = vadd.f32 %v1155, %v1230
    %v1232 = vpop.f32.mrb[0].mxu0
    %1233 = vmatprep.mubr.f32.mxu0 0.0
    %1234 = vmatmul.mubr.f32.gmra.mrb[0].mxu0 %v493
    %v1235 = vpop.f32.mrb[0].mxu0
    %v1236 = vadd.f32 %v1156, %v1235
    %v1237 = vpop.f32.mrb[0].mxu0
    %1238 = vmatprep.mubr.f32.mxu0 0.0
    %1239 = vmatmul.mubr.f32.gmra.mrb[0].mxu0 %v496
    %v1240 = vpop.f32.mrb[0].mxu0
    %v1241 = vadd.f32 %v1157, %v1240
    %v1242 = vpop.f32.mrb[0].mxu0
    %1243 = vmatprep.mubr.f32.mxu0 0.0
    %1244 = vmatmul.mubr.f32.gmra.mrb[0].mxu0 %v499
    %v1245 = vpop.f32.mrb[0].mxu0
    %v1246 = vadd.f32 %v1158, %v1245
    %v1247 = vpop.f32.mrb[0].mxu0
    %1248 = vdwg.mxu0
    %v1249 = vmax.f32 %v1226, 0.0
    %v1250 = vmax.f32 %v1231, 0.0
    %v1251 = vmax.f32 %v1236, 0.0
    %v1252 = vmax.f32 %v1241, 0.0
    %v1253 = vmax.f32 %v1246, 0.0
    %s1254 = scalar_lea.vmem [#allocation2], 288
    %v1255 = vld [vmem:[%s1254] sm:$0xff]
    %v1256 = vld [vmem:[%s1254 + $0x8] sm:$0xff]
    %v1257 = vld [vmem:[%s1254 + $0x10] sm:$0xff]
    %v1258 = vld [vmem:[%s1254 + $0x18] sm:$0xff]
    %v1259 = vld [vmem:[%s5 + $0x7] sm:$0x1]
    %v1260 = vlaneseq
    %v1261 = vshrl.u32 %v1260, 7
    %v1262 = vsub.s32 0, %v1261
    %v1263 = vrot.slane %v1259, %v1262
    %v1265 = vsel %vm146, %v1249, 0
    %v1268 = vsel %vm146, %v1250, 0
    %v1271 = vsel %vm146, %v1251, 0
    %v1274 = vsel %vm146, %v1252, 0
    %v1277 = vsel %vm146, %v1253, 0
    %1279 = vmatprep.subr.mxu0 0.0
    %1280 = vmatpush1.msra.mxu0 %v1255
    %1281 = vmatprep.subr.mxu0 0.0
    %1282 = vmatpush1.msra.mxu0 %v1256
    %1283 = vmatprep.subr.mxu0 0.0
    %1284 = vmatpush1.msra.mxu0 %v1257
    %1285 = vmatprep.subr.mxu0 0.0
    %1286 = vmatpush1.msra.mxu0 %v1258
    %1287 = vmatprep.subr.mxu0 0.0
    %1288 = vmatpush1.msra.mxu0 0.0
    %1289 = vmatprep.subr.mxu0 0.0
    %1290 = vmatpush1.msra.mxu0 0.0
    %1291 = vmatprep.subr.mxu0 0.0
    %1292 = vmatpush1.msra.mxu0 0.0
    %1293 = vmatprep.subr.mxu0 0.0
    %1294 = vmatpush1.msra.mxu0 0.0
    %1295 = vmatprep.subr.mxu0 0.0
    %1296 = vmatpush1.msra.mxu0 0.0
    %1297 = vmatprep.subr.mxu0 0.0
    %1298 = vmatpush1.msra.mxu0 0.0
    %1299 = vmatprep.subr.mxu0 0.0
    %1300 = vmatpush1.msra.mxu0 0.0
    %1301 = vmatprep.subr.mxu0 0.0
    %1302 = vmatpush1.msra.mxu0 0.0
    %1303 = vmatprep.subr.mxu0 0.0
    %1304 = vmatpush1.msra.mxu0 0.0
    %1305 = vmatprep.subr.mxu0 0.0
    %1306 = vmatpush1.msra.mxu0 0.0
    %1307 = vmatprep.subr.mxu0 0.0
    %1308 = vmatpush1.msra.mxu0 0.0
    %1309 = vmatprep.subr.mxu0 0.0
    %1310 = vmatpush1.msra.mxu0 0.0
    %1311 = vmatprep.subr.mxu0 0.0
    %1312 = vmatpush1.msra.mxu0 0.0
    %1313 = vmatprep.subr.mxu0 0.0
    %1314 = vmatpush1.msra.mxu0 0.0
    %1315 = vmatprep.subr.mxu0 0.0
    %1316 = vmatpush1.msra.mxu0 0.0
    %1317 = vmatprep.subr.mxu0 0.0
    %1318 = vmatpush1.msra.mxu0 0.0
    %1319 = vmatprep.subr.mxu0 0.0
    %1320 = vmatpush1.msra.mxu0 0.0
    %1321 = vmatprep.subr.mxu0 0.0
    %1322 = vmatpush1.msra.mxu0 0.0
    %1323 = vmatprep.subr.mxu0 0.0
    %1324 = vmatpush1.msra.mxu0 0.0
    %1325 = vmatprep.subr.mxu0 0.0
    %1326 = vmatpush1.msra.mxu0 0.0
    %1327 = vmatprep.subr.mxu0 0.0
    %1328 = vmatpush1.msra.mxu0 0.0
    %1329 = vmatprep.subr.mxu0 0.0
    %1330 = vmatpush1.msra.mxu0 0.0
    %1331 = vmatprep.subr.mxu0 0.0
    %1332 = vmatpush1.msra.mxu0 0.0
    %1333 = vmatprep.subr.mxu0 0.0
    %1334 = vmatpush1.msra.mxu0 0.0
    %1335 = vmatprep.subr.mxu0 0.0
    %1336 = vmatpush1.msra.mxu0 0.0
    %1337 = vmatprep.subr.mxu0 0.0
    %1338 = vmatpush1.msra.mxu0 0.0
    %1339 = vmatprep.subr.mxu0 0.0
    %1340 = vmatpush1.msra.mxu0 0.0
    %1341 = vmatprep.subr.mxu0 0.0
    %1342 = vmatpush1.msra.mxu0 0.0
    %1343 = vmatprep.mubr.f32.mxu0 0.0
    %1344 = vmatmul.mubr.f32.gmra.mrb[0].mxu0 %v1265
    %v1345 = vpop.f32.mrb[0].mxu0
    %v1346 = vadd.f32 %v1263, %v1345
    %v1347 = vpop.f32.mrb[0].mxu0
    %1348 = vmatprep.mubr.f32.mxu0 0.0
    %1349 = vmatmul.mubr.f32.gmra.mrb[0].mxu0 %v1268
    %v1350 = vpop.f32.mrb[0].mxu0
    %v1351 = vadd.f32 %v1263, %v1350
    %v1352 = vpop.f32.mrb[0].mxu0
    %1353 = vmatprep.mubr.f32.mxu0 0.0
    %1354 = vmatmul.mubr.f32.gmra.mrb[0].mxu0 %v1271
    %v1355 = vpop.f32.mrb[0].mxu0
    %v1356 = vadd.f32 %v1263, %v1355
    %v1357 = vpop.f32.mrb[0].mxu0
    %1358 = vmatprep.mubr.f32.mxu0 0.0
    %1359 = vmatmul.mubr.f32.gmra.mrb[0].mxu0 %v1274
    %v1360 = vpop.f32.mrb[0].mxu0
    %v1361 = vadd.f32 %v1263, %v1360
    %v1362 = vpop.f32.mrb[0].mxu0
    %1363 = vmatprep.mubr.f32.mxu0 0.0
    %1364 = vmatmul.mubr.f32.gmra.mrb[0].mxu0 %v1277
    %v1365 = vpop.f32.mrb[0].mxu0
    %v1366 = vadd.f32 %v1263, %v1365
    %v1367 = vpop.f32.mrb[0].mxu0
    %1368 = vdwg.mxu0
    %1369 = vmatprep.subr.mxu0 0.0
    %1370 = vmatpush1.msra.mxu0 %v1346
    %1371 = vmatprep.subr.mxu0 0.0
    %1372 = vmatpush1.msra.mxu0 %v1351
    %1373 = vmatprep.subr.mxu0 0.0
    %1374 = vmatpush1.msra.mxu0 %v1356
    %1375 = vmatprep.subr.mxu0 0.0
    %1376 = vmatpush1.msra.mxu0 %v1361
    %1377 = vmatprep.subr.mxu0 0.0
    %1378 = vmatpush1.msra.mxu0 %v1366
    %1379 = vmatprep.subr.mxu0 0.0
    %1380 = vmatpush1.msra.mxu0 0.0
    %1381 = vmatprep.subr.mxu0 0.0
    %1382 = vmatpush1.msra.mxu0 0.0
    %1383 = vmatprep.subr.mxu0 0.0
    %1384 = vmatpush1.msra.mxu0 0.0
    %1385 = vmatprep.subr.mxu0 0.0
    %1386 = vmatpush1.msra.mxu0 0.0
    %1387 = vmatprep.subr.mxu0 0.0
    %1388 = vmatpush1.msra.mxu0 0.0
    %1389 = vmatprep.subr.mxu0 0.0
    %1390 = vmatpush1.msra.mxu0 0.0
    %1391 = vmatprep.subr.mxu0 0.0
    %1392 = vmatpush1.msra.mxu0 0.0
    %1393 = vmatprep.subr.mxu0 0.0
    %1394 = vmatpush1.msra.mxu0 0.0
    %1395 = vmatprep.subr.mxu0 0.0
    %1396 = vmatpush1.msra.mxu0 0.0
    %1397 = vmatprep.subr.mxu0 0.0
    %1398 = vmatpush1.msra.mxu0 0.0
    %1399 = vmatprep.subr.mxu0 0.0
    %1400 = vmatpush1.msra.mxu0 0.0
    %1401 = vmatprep.subr.mxu0 0.0
    %1402 = vmatpush1.msra.mxu0 0.0
    %1403 = vmatprep.subr.mxu0 0.0
    %1404 = vmatpush1.msra.mxu0 0.0
    %1405 = vmatprep.subr.mxu0 0.0
    %1406 = vmatpush1.msra.mxu0 0.0
    %1407 = vmatprep.subr.mxu0 0.0
    %1408 = vmatpush1.msra.mxu0 0.0
    %1409 = vmatprep.subr.mxu0 0.0
    %1410 = vmatpush1.msra.mxu0 0.0
    %1411 = vmatprep.subr.mxu0 0.0
    %1412 = vmatpush1.msra.mxu0 0.0
    %1413 = vmatprep.subr.mxu0 0.0
    %1414 = vmatpush1.msra.mxu0 0.0
    %1415 = vmatprep.subr.mxu0 0.0
    %1416 = vmatpush1.msra.mxu0 0.0
    %1417 = vmatprep.subr.mxu0 0.0
    %1418 = vmatpush1.msra.mxu0 0.0
    %1419 = vmatprep.subr.mxu0 0.0
    %1420 = vmatpush1.msra.mxu0 0.0
    %1421 = vmatprep.subr.mxu0 0.0
    %1422 = vmatpush1.msra.mxu0 0.0
    %1423 = vmatprep.subr.mxu0 0.0
    %1424 = vmatpush1.msra.mxu0 0.0
    %1425 = vmatprep.subr.mxu0 0.0
    %1426 = vmatpush1.msra.mxu0 0.0
    %1427 = vmatprep.subr.mxu0 0.0
    %1428 = vmatpush1.msra.mxu0 0.0
    %1429 = vmatprep.subr.mxu0 0.0
    %1430 = vmatpush1.msra.mxu0 0.0
    %1431 = vmatprep.subr.mxu0 0.0
    %1432 = vmatpush1.msra.mxu0 0.0
    %1433 = vmatprep.mubr.f32.mxu0 0.0
    %1434 = vmatmul.mubr.f32.gmra.mrb[0].mxu0 %v713
    %v1435 = vpop.f32.mrb[0].mxu0
    %v1436 = vadd.f32 %v985, %v1435
    %v1437 = vpop.f32.mrb[0].mxu0
    %1438 = vmatprep.mubr.f32.mxu0 0.0
    %1439 = vmatmul.mubr.f32.gmra.mrb[0].mxu0 %v716
    %v1440 = vpop.f32.mrb[0].mxu0
    %v1441 = vadd.f32 %v990, %v1440
    %v1442 = vpop.f32.mrb[0].mxu0
    %1443 = vdwg.mxu0
    %v1444 = vld [vmem:[%s5 + $0x8] sm:$0x1]
    %v1445 = vlaneseq
    %v1446 = vshrl.u32 %v1445, 7
    %v1447 = vsub.s32 0, %v1446
    %v1448 = vrot.slane %v1444, %v1447
    %v1449 = vmul.f32 %v1436, %v1448
    %v1450 = vmul.f32 %v1441, %v1448
    %v1451 = vld [vmem:[%s5 + $0x9] sm:$0x1]
    %v1452 = vlaneseq
    %v1453 = vshrl.u32 %v1452, 7
    %v1454 = vsub.s32 0, %v1453
    %v1455 = vrot.slane %v1451, %v1454
    %v1456 = vadd.f32 %v1449, %v1455
    %v1457 = vadd.f32 %v1450, %v1455
    %v1458 = vmax.f32 %v1456, 0.0
    %v1459 = vmax.f32 %v1457, 0.0
    %v1460 = vadd.f32 %v1458, %v807
    %v1461 = vadd.f32 %v1459, %v808
    %s1462 = scalar_lea.vmem [#allocation2], 320
    %v1463 = vld [vmem:[%s1462] sm:$0xff]
    %v1464 = vld [vmem:[%s1462 + $0x8] sm:$0xff]
    %v1465 = vld [vmem:[%s1462 + $0x10] sm:$0xff]
    %v1466 = vld [vmem:[%s1462 + $0x18] sm:$0xff]
    %v1467 = vld [vmem:[%s5 + $0xa] sm:$0x1]
    %v1468 = vlaneseq
    %v1469 = vshrl.u32 %v1468, 7
    %v1470 = vsub.s32 0, %v1469
    %v1471 = vrot.slane %v1467, %v1470
    %v1473 = vsel %vm146, %v1460, 0
    %v1476 = vsel %vm146, %v1461, 0
    %1478 = vmatprep.subr.mxu0 0.0
    %1479 = vmatpush1.msra.mxu0 %v1463
    %1480 = vmatprep.subr.mxu0 0.0
    %1481 = vmatpush1.msra.mxu0 %v1464
    %1482 = vmatprep.subr.mxu0 0.0
    %1483 = vmatpush1.msra.mxu0 %v1465
    %1484 = vmatprep.subr.mxu0 0.0
    %1485 = vmatpush1.msra.mxu0 %v1466
    %1486 = vmatprep.subr.mxu0 0.0
    %1487 = vmatpush1.msra.mxu0 0.0
    %1488 = vmatprep.subr.mxu0 0.0
    %1489 = vmatpush1.msra.mxu0 0.0
    %1490 = vmatprep.subr.mxu0 0.0
    %1491 = vmatpush1.msra.mxu0 0.0
    %1492 = vmatprep.subr.mxu0 0.0
    %1493 = vmatpush1.msra.mxu0 0.0
    %1494 = vmatprep.subr.mxu0 0.0
    %1495 = vmatpush1.msra.mxu0 0.0
    %1496 = vmatprep.subr.mxu0 0.0
    %1497 = vmatpush1.msra.mxu0 0.0
    %1498 = vmatprep.subr.mxu0 0.0
    %1499 = vmatpush1.msra.mxu0 0.0
    %1500 = vmatprep.subr.mxu0 0.0
    %1501 = vmatpush1.msra.mxu0 0.0
    %1502 = vmatprep.subr.mxu0 0.0
    %1503 = vmatpush1.msra.mxu0 0.0
    %1504 = vmatprep.subr.mxu0 0.0
    %1505 = vmatpush1.msra.mxu0 0.0
    %1506 = vmatprep.subr.mxu0 0.0
    %1507 = vmatpush1.msra.mxu0 0.0
    %1508 = vmatprep.subr.mxu0 0.0
    %1509 = vmatpush1.msra.mxu0 0.0
    %1510 = vmatprep.subr.mxu0 0.0
    %1511 = vmatpush1.msra.mxu0 0.0
    %1512 = vmatprep.subr.mxu0 0.0
    %1513 = vmatpush1.msra.mxu0 0.0
    %1514 = vmatprep.subr.mxu0 0.0
    %1515 = vmatpush1.msra.mxu0 0.0
    %1516 = vmatprep.subr.mxu0 0.0
    %1517 = vmatpush1.msra.mxu0 0.0
    %1518 = vmatprep.subr.mxu0 0.0
    %1519 = vmatpush1.msra.mxu0 0.0
    %1520 = vmatprep.subr.mxu0 0.0
    %1521 = vmatpush1.msra.mxu0 0.0
    %1522 = vmatprep.subr.mxu0 0.0
    %1523 = vmatpush1.msra.mxu0 0.0
    %1524 = vmatprep.subr.mxu0 0.0
    %1525 = vmatpush1.msra.mxu0 0.0
    %1526 = vmatprep.subr.mxu0 0.0
    %1527 = vmatpush1.msra.mxu0 0.0
    %1528 = vmatprep.subr.mxu0 0.0
    %1529 = vmatpush1.msra.mxu0 0.0
    %1530 = vmatprep.subr.mxu0 0.0
    %1531 = vmatpush1.msra.mxu0 0.0
    %1532 = vmatprep.subr.mxu0 0.0
    %1533 = vmatpush1.msra.mxu0 0.0
    %1534 = vmatprep.subr.mxu0 0.0
    %1535 = vmatpush1.msra.mxu0 0.0
    %1536 = vmatprep.subr.mxu0 0.0
    %1537 = vmatpush1.msra.mxu0 0.0
    %1538 = vmatprep.subr.mxu0 0.0
    %1539 = vmatpush1.msra.mxu0 0.0
    %1540 = vmatprep.subr.mxu0 0.0
    %1541 = vmatpush1.msra.mxu0 0.0
    %1542 = vmatprep.mubr.f32.mxu0 0.0
    %1543 = vmatmul.mubr.f32.gmra.mrb[0].mxu0 %v1473
    %v1544 = vpop.f32.mrb[0].mxu0
    %v1545 = vadd.f32 %v1471, %v1544
    %v1546 = vpop.f32.mrb[0].mxu0
    %1547 = vmatprep.mubr.f32.mxu0 0.0
    %1548 = vmatmul.mubr.f32.gmra.mrb[0].mxu0 %v1476
    %v1549 = vpop.f32.mrb[0].mxu0
    %v1550 = vadd.f32 %v1471, %v1549
    %v1551 = vpop.f32.mrb[0].mxu0
    %1552 = vdwg.mxu0
    %v1553 = vmax.f32 %v1545, 0.0
    %v1554 = vmax.f32 %v1550, 0.0
    %s1555 = scalar_lea.vmem [#allocation2], 352
    %v1556 = vld [vmem:[%s1555] sm:$0xff]
    %v1557 = vld [vmem:[%s1555 + $0x8] sm:$0xff]
    %v1558 = vld [vmem:[%s1555 + $0x10] sm:$0xff]
    %v1559 = vld [vmem:[%s1555 + $0x18] sm:$0xff]
    %v1560 = vld [vmem:[%s5 + $0xb] sm:$0x1]
    %v1561 = vlaneseq
    %v1562 = vshrl.u32 %v1561, 7
    %v1563 = vsub.s32 0, %v1562
    %v1564 = vrot.slane %v1560, %v1563
    %v1566 = vsel %vm146, %v1553, 0
    %v1569 = vsel %vm146, %v1554, 0
    %1571 = vmatprep.subr.mxu0 0.0
    %1572 = vmatpush1.msra.mxu0 %v1556
    %1573 = vmatprep.subr.mxu0 0.0
    %1574 = vmatpush1.msra.mxu0 %v1557
    %1575 = vmatprep.subr.mxu0 0.0
    %1576 = vmatpush1.msra.mxu0 %v1558
    %1577 = vmatprep.subr.mxu0 0.0
    %1578 = vmatpush1.msra.mxu0 %v1559
    %1579 = vmatprep.subr.mxu0 0.0
    %1580 = vmatpush1.msra.mxu0 0.0
    %1581 = vmatprep.subr.mxu0 0.0
    %1582 = vmatpush1.msra.mxu0 0.0
    %1583 = vmatprep.subr.mxu0 0.0
    %1584 = vmatpush1.msra.mxu0 0.0
    %1585 = vmatprep.subr.mxu0 0.0
    %1586 = vmatpush1.msra.mxu0 0.0
    %1587 = vmatprep.subr.mxu0 0.0
    %1588 = vmatpush1.msra.mxu0 0.0
    %1589 = vmatprep.subr.mxu0 0.0
    %1590 = vmatpush1.msra.mxu0 0.0
    %1591 = vmatprep.subr.mxu0 0.0
    %1592 = vmatpush1.msra.mxu0 0.0
    %1593 = vmatprep.subr.mxu0 0.0
    %1594 = vmatpush1.msra.mxu0 0.0
    %1595 = vmatprep.subr.mxu0 0.0
    %1596 = vmatpush1.msra.mxu0 0.0
    %1597 = vmatprep.subr.mxu0 0.0
    %1598 = vmatpush1.msra.mxu0 0.0
    %1599 = vmatprep.subr.mxu0 0.0
    %1600 = vmatpush1.msra.mxu0 0.0
    %1601 = vmatprep.subr.mxu0 0.0
    %1602 = vmatpush1.msra.mxu0 0.0
    %1603 = vmatprep.subr.mxu0 0.0
    %1604 = vmatpush1.msra.mxu0 0.0
    %1605 = vmatprep.subr.mxu0 0.0
    %1606 = vmatpush1.msra.mxu0 0.0
    %1607 = vmatprep.subr.mxu0 0.0
    %1608 = vmatpush1.msra.mxu0 0.0
    %1609 = vmatprep.subr.mxu0 0.0
    %1610 = vmatpush1.msra.mxu0 0.0
    %1611 = vmatprep.subr.mxu0 0.0
    %1612 = vmatpush1.msra.mxu0 0.0
    %1613 = vmatprep.subr.mxu0 0.0
    %1614 = vmatpush1.msra.mxu0 0.0
    %1615 = vmatprep.subr.mxu0 0.0
    %1616 = vmatpush1.msra.mxu0 0.0
    %1617 = vmatprep.subr.mxu0 0.0
    %1618 = vmatpush1.msra.mxu0 0.0
    %1619 = vmatprep.subr.mxu0 0.0
    %1620 = vmatpush1.msra.mxu0 0.0
    %1621 = vmatprep.subr.mxu0 0.0
    %1622 = vmatpush1.msra.mxu0 0.0
    %1623 = vmatprep.subr.mxu0 0.0
    %1624 = vmatpush1.msra.mxu0 0.0
    %1625 = vmatprep.subr.mxu0 0.0
    %1626 = vmatpush1.msra.mxu0 0.0
    %1627 = vmatprep.subr.mxu0 0.0
    %1628 = vmatpush1.msra.mxu0 0.0
    %1629 = vmatprep.subr.mxu0 0.0
    %1630 = vmatpush1.msra.mxu0 0.0
    %1631 = vmatprep.subr.mxu0 0.0
    %1632 = vmatpush1.msra.mxu0 0.0
    %1633 = vmatprep.subr.mxu0 0.0
    %1634 = vmatpush1.msra.mxu0 0.0
    %1635 = vmatprep.mubr.f32.mxu0 0.0
    %1636 = vmatmul.mubr.f32.gmra.mrb[0].mxu0 %v1566
    %v1637 = vpop.f32.mrb[0].mxu0
    %v1638 = vadd.f32 %v1564, %v1637
    %v1639 = vpop.f32.mrb[0].mxu0
    %1640 = vmatprep.mubr.f32.mxu0 0.0
    %1641 = vmatmul.mubr.f32.gmra.mrb[0].mxu0 %v1569
    %v1642 = vpop.f32.mrb[0].mxu0
    %v1643 = vadd.f32 %v1564, %v1642
    %v1644 = vpop.f32.mrb[0].mxu0
    %1645 = vdwg.mxu0
    %s1646 = scalar_lea.vmem [#allocation2], 384
    %v1647 = vld [vmem:[%s1646] sm:$0xff]
    %v1648 = vld [vmem:[%s1646 + $0x8] sm:$0xff]
    %v1649 = vld [vmem:[%s1646 + $0x10] sm:$0xff]
    %v1650 = vld [vmem:[%s1646 + $0x18] sm:$0xff]
    %1651 = vmatprep.subr.mxu0 0.0
    %1652 = vmatpush1.msra.mxu0 %v1647
    %1653 = vmatprep.subr.mxu0 0.0
    %1654 = vmatpush1.msra.mxu0 %v1648
    %1655 = vmatprep.subr.mxu0 0.0
    %1656 = vmatpush1.msra.mxu0 %v1649
    %1657 = vmatprep.subr.mxu0 0.0
    %1658 = vmatpush1.msra.mxu0 %v1650
    %1659 = vmatprep.subr.mxu0 0.0
    %1660 = vmatpush1.msra.mxu0 0.0
    %1661 = vmatprep.subr.mxu0 0.0
    %1662 = vmatpush1.msra.mxu0 0.0
    %1663 = vmatprep.subr.mxu0 0.0
    %1664 = vmatpush1.msra.mxu0 0.0
    %1665 = vmatprep.subr.mxu0 0.0
    %1666 = vmatpush1.msra.mxu0 0.0
    %1667 = vmatprep.subr.mxu0 0.0
    %1668 = vmatpush1.msra.mxu0 0.0
    %1669 = vmatprep.subr.mxu0 0.0
    %1670 = vmatpush1.msra.mxu0 0.0
    %1671 = vmatprep.subr.mxu0 0.0
    %1672 = vmatpush1.msra.mxu0 0.0
    %1673 = vmatprep.subr.mxu0 0.0
    %1674 = vmatpush1.msra.mxu0 0.0
    %1675 = vmatprep.subr.mxu0 0.0
    %1676 = vmatpush1.msra.mxu0 0.0
    %1677 = vmatprep.subr.mxu0 0.0
    %1678 = vmatpush1.msra.mxu0 0.0
    %1679 = vmatprep.subr.mxu0 0.0
    %1680 = vmatpush1.msra.mxu0 0.0
    %1681 = vmatprep.subr.mxu0 0.0
    %1682 = vmatpush1.msra.mxu0 0.0
    %1683 = vmatprep.subr.mxu0 0.0
    %1684 = vmatpush1.msra.mxu0 0.0
    %1685 = vmatprep.subr.mxu0 0.0
    %1686 = vmatpush1.msra.mxu0 0.0
    %1687 = vmatprep.subr.mxu0 0.0
    %1688 = vmatpush1.msra.mxu0 0.0
    %1689 = vmatprep.subr.mxu0 0.0
    %1690 = vmatpush1.msra.mxu0 0.0
    %1691 = vmatprep.subr.mxu0 0.0
    %1692 = vmatpush1.msra.mxu0 0.0
    %1693 = vmatprep.subr.mxu0 0.0
    %1694 = vmatpush1.msra.mxu0 0.0
    %1695 = vmatprep.subr.mxu0 0.0
    %1696 = vmatpush1.msra.mxu0 0.0
    %1697 = vmatprep.subr.mxu0 0.0
    %1698 = vmatpush1.msra.mxu0 0.0
    %1699 = vmatprep.subr.mxu0 0.0
    %1700 = vmatpush1.msra.mxu0 0.0
    %1701 = vmatprep.subr.mxu0 0.0
    %1702 = vmatpush1.msra.mxu0 0.0
    %1703 = vmatprep.subr.mxu0 0.0
    %1704 = vmatpush1.msra.mxu0 0.0
    %1705 = vmatprep.subr.mxu0 0.0
    %1706 = vmatpush1.msra.mxu0 0.0
    %1707 = vmatprep.subr.mxu0 0.0
    %1708 = vmatpush1.msra.mxu0 0.0
    %1709 = vmatprep.subr.mxu0 0.0
    %1710 = vmatpush1.msra.mxu0 0.0
    %1711 = vmatprep.subr.mxu0 0.0
    %1712 = vmatpush1.msra.mxu0 0.0
    %1713 = vmatprep.subr.mxu0 0.0
    %1714 = vmatpush1.msra.mxu0 0.0
    %1715 = vmatprep.mubr.f32.mxu0 0.0
    %1716 = vmatmul.mubr.f32.gmra.mrb[0].mxu0 %v1566
    %v1717 = vpop.f32.mrb[0].mxu0
    %v1718 = vadd.f32 0.0, %v1717
    %v1719 = vpop.f32.mrb[0].mxu0
    %1720 = vmatprep.mubr.f32.mxu0 0.0
    %1721 = vmatmul.mubr.f32.gmra.mrb[0].mxu0 %v1569
    %v1722 = vpop.f32.mrb[0].mxu0
    %v1723 = vadd.f32 0.0, %v1722
    %v1724 = vpop.f32.mrb[0].mxu0
    %1725 = vdwg.mxu0
    %s1726 = scalar_lea.vmem [#allocation2], 416
    %v1727 = vld [vmem:[%s1726] sm:$0xff]
    %v1728 = vld [vmem:[%s1726 + $0x8] sm:$0xff]
    %v1729 = vld [vmem:[%s1726 + $0x10] sm:$0xff]
    %v1730 = vld [vmem:[%s1726 + $0x18] sm:$0xff]
    %1731 = vmatprep.subr.mxu0 0.0
    %1732 = vmatpush1.msra.mxu0 %v1727
    %1733 = vmatprep.subr.mxu0 0.0
    %1734 = vmatpush1.msra.mxu0 %v1728
    %1735 = vmatprep.subr.mxu0 0.0
    %1736 = vmatpush1.msra.mxu0 %v1729
    %1737 = vmatprep.subr.mxu0 0.0
    %1738 = vmatpush1.msra.mxu0 %v1730
    %1739 = vmatprep.subr.mxu0 0.0
    %1740 = vmatpush1.msra.mxu0 0.0
    %1741 = vmatprep.subr.mxu0 0.0
    %1742 = vmatpush1.msra.mxu0 0.0
    %1743 = vmatprep.subr.mxu0 0.0
    %1744 = vmatpush1.msra.mxu0 0.0
    %1745 = vmatprep.subr.mxu0 0.0
    %1746 = vmatpush1.msra.mxu0 0.0
    %1747 = vmatprep.subr.mxu0 0.0
    %1748 = vmatpush1.msra.mxu0 0.0
    %1749 = vmatprep.subr.mxu0 0.0
    %1750 = vmatpush1.msra.mxu0 0.0
    %1751 = vmatprep.subr.mxu0 0.0
    %1752 = vmatpush1.msra.mxu0 0.0
    %1753 = vmatprep.subr.mxu0 0.0
    %1754 = vmatpush1.msra.mxu0 0.0
    %1755 = vmatprep.subr.mxu0 0.0
    %1756 = vmatpush1.msra.mxu0 0.0
    %1757 = vmatprep.subr.mxu0 0.0
    %1758 = vmatpush1.msra.mxu0 0.0
    %1759 = vmatprep.subr.mxu0 0.0
    %1760 = vmatpush1.msra.mxu0 0.0
    %1761 = vmatprep.subr.mxu0 0.0
    %1762 = vmatpush1.msra.mxu0 0.0
    %1763 = vmatprep.subr.mxu0 0.0
    %1764 = vmatpush1.msra.mxu0 0.0
    %1765 = vmatprep.subr.mxu0 0.0
    %1766 = vmatpush1.msra.mxu0 0.0
    %1767 = vmatprep.subr.mxu0 0.0
    %1768 = vmatpush1.msra.mxu0 0.0
    %1769 = vmatprep.subr.mxu0 0.0
    %1770 = vmatpush1.msra.mxu0 0.0
    %1771 = vmatprep.subr.mxu0 0.0
    %1772 = vmatpush1.msra.mxu0 0.0
    %1773 = vmatprep.subr.mxu0 0.0
    %1774 = vmatpush1.msra.mxu0 0.0
    %1775 = vmatprep.subr.mxu0 0.0
    %1776 = vmatpush1.msra.mxu0 0.0
    %1777 = vmatprep.subr.mxu0 0.0
    %1778 = vmatpush1.msra.mxu0 0.0
    %1779 = vmatprep.subr.mxu0 0.0
    %1780 = vmatpush1.msra.mxu0 0.0
    %1781 = vmatprep.subr.mxu0 0.0
    %1782 = vmatpush1.msra.mxu0 0.0
    %1783 = vmatprep.subr.mxu0 0.0
    %1784 = vmatpush1.msra.mxu0 0.0
    %1785 = vmatprep.subr.mxu0 0.0
    %1786 = vmatpush1.msra.mxu0 0.0
    %1787 = vmatprep.subr.mxu0 0.0
    %1788 = vmatpush1.msra.mxu0 0.0
    %1789 = vmatprep.subr.mxu0 0.0
    %1790 = vmatpush1.msra.mxu0 0.0
    %1791 = vmatprep.subr.mxu0 0.0
    %1792 = vmatpush1.msra.mxu0 0.0
    %1793 = vmatprep.subr.mxu0 0.0
    %1794 = vmatpush1.msra.mxu0 0.0
    %1795 = vmatprep.mubr.f32.mxu0 0.0
    %1796 = vmatmul.mubr.f32.gmra.mrb[0].mxu0 %v1566
    %v1797 = vpop.f32.mrb[0].mxu0
    %v1798 = vadd.f32 0.0, %v1797
    %v1799 = vpop.f32.mrb[0].mxu0
    %1800 = vmatprep.mubr.f32.mxu0 0.0
    %1801 = vmatmul.mubr.f32.gmra.mrb[0].mxu0 %v1569
    %v1802 = vpop.f32.mrb[0].mxu0
    %v1803 = vadd.f32 0.0, %v1802
    %v1804 = vpop.f32.mrb[0].mxu0
    %1805 = vdwg.mxu0
    %s1806 = scalar_lea.vmem %s3, 80
    %v1807 = vld [vmem:[%s1806] sm:$0xff]
    %v1808 = vld [vmem:[%s1806 + $0x8] sm:$0xff]
    %v1809 = vld [vmem:[%s1806 + $0x10] sm:$0xff]
    %v1810 = vld [vmem:[%s1806 + $0x18] sm:$0xff]
    %v1811 = vld [vmem:[%s1806 + $0x20] sm:$0xff]
    %1812 = vmatprep.subr.mxu0 0.0
    %1813 = vmatpush1.msra.mxu0 %v1718
    %1814 = vmatprep.subr.mxu0 0.0
    %1815 = vmatpush1.msra.mxu0 %v1723
    %1816 = vmatprep.subr.mxu0 0.0
    %1817 = vmatpush1.msra.mxu0 %v1798
    %1818 = vmatprep.subr.mxu0 0.0
    %1819 = vmatpush1.msra.mxu0 %v1803
    %1820 = vmatprep.subr.mxu0 0.0
    %1821 = vmatpush1.msra.mxu0 0.0
    %1822 = vmatprep.subr.mxu0 0.0
    %1823 = vmatpush1.msra.mxu0 0.0
    %1824 = vmatprep.subr.mxu0 0.0
    %1825 = vmatpush1.msra.mxu0 0.0
    %1826 = vmatprep.subr.mxu0 0.0
    %1827 = vmatpush1.msra.mxu0 0.0
    %1828 = vmatprep.subr.mxu0 0.0
    %1829 = vmatpush1.msra.mxu0 0.0
    %1830 = vmatprep.subr.mxu0 0.0
    %1831 = vmatpush1.msra.mxu0 0.0
    %1832 = vmatprep.subr.mxu0 0.0
    %1833 = vmatpush1.msra.mxu0 0.0
    %1834 = vmatprep.subr.mxu0 0.0
    %1835 = vmatpush1.msra.mxu0 0.0
    %1836 = vmatprep.subr.mxu0 0.0
    %1837 = vmatpush1.msra.mxu0 0.0
    %1838 = vmatprep.subr.mxu0 0.0
    %1839 = vmatpush1.msra.mxu0 0.0
    %1840 = vmatprep.subr.mxu0 0.0
    %1841 = vmatpush1.msra.mxu0 0.0
    %1842 = vmatprep.subr.mxu0 0.0
    %1843 = vmatpush1.msra.mxu0 0.0
    %1844 = vmatprep.subr.mxu0 0.0
    %1845 = vmatpush1.msra.mxu0 0.0
    %1846 = vmatprep.subr.mxu0 0.0
    %1847 = vmatpush1.msra.mxu0 0.0
    %1848 = vmatprep.subr.mxu0 0.0
    %1849 = vmatpush1.msra.mxu0 0.0
    %1850 = vmatprep.subr.mxu0 0.0
    %1851 = vmatpush1.msra.mxu0 0.0
    %1852 = vmatprep.subr.mxu0 0.0
    %1853 = vmatpush1.msra.mxu0 0.0
    %1854 = vmatprep.subr.mxu0 0.0
    %1855 = vmatpush1.msra.mxu0 0.0
    %1856 = vmatprep.subr.mxu0 0.0
    %1857 = vmatpush1.msra.mxu0 0.0
    %1858 = vmatprep.subr.mxu0 0.0
    %1859 = vmatpush1.msra.mxu0 0.0
    %1860 = vmatprep.subr.mxu0 0.0
    %1861 = vmatpush1.msra.mxu0 0.0
    %1862 = vmatprep.subr.mxu0 0.0
    %1863 = vmatpush1.msra.mxu0 0.0
    %1864 = vmatprep.subr.mxu0 0.0
    %1865 = vmatpush1.msra.mxu0 0.0
    %1866 = vmatprep.subr.mxu0 0.0
    %1867 = vmatpush1.msra.mxu0 0.0
    %1868 = vmatprep.subr.mxu0 0.0
    %1869 = vmatpush1.msra.mxu0 0.0
    %1870 = vmatprep.subr.mxu0 0.0
    %1871 = vmatpush1.msra.mxu0 0.0
    %1872 = vmatprep.subr.mxu0 0.0
    %1873 = vmatpush1.msra.mxu0 0.0
    %1874 = vmatprep.subr.mxu0 0.0
    %1875 = vmatpush1.msra.mxu0 0.0
    %1876 = vmatprep.mubr.f32.mxu0 0.0
    %1877 = vmatmul.mubr.f32.gmra.mrb[0].mxu0 %v487
    %v1878 = vpop.f32.mrb[0].mxu0
    %v1879 = vadd.f32 %v1807, %v1878
    %v1880 = vpop.f32.mrb[0].mxu0
    %1881 = vmatprep.mubr.f32.mxu0 0.0
    %1882 = vmatmul.mubr.f32.gmra.mrb[0].mxu0 %v490
    %v1883 = vpop.f32.mrb[0].mxu0
    %v1884 = vadd.f32 %v1808, %v1883
    %v1885 = vpop.f32.mrb[0].mxu0
    %1886 = vmatprep.mubr.f32.mxu0 0.0
    %1887 = vmatmul.mubr.f32.gmra.mrb[0].mxu0 %v493
    %v1888 = vpop.f32.mrb[0].mxu0
    %v1889 = vadd.f32 %v1809, %v1888
    %v1890 = vpop.f32.mrb[0].mxu0
    %1891 = vmatprep.mubr.f32.mxu0 0.0
    %1892 = vmatmul.mubr.f32.gmra.mrb[0].mxu0 %v496
    %v1893 = vpop.f32.mrb[0].mxu0
    %v1894 = vadd.f32 %v1810, %v1893
    %v1895 = vpop.f32.mrb[0].mxu0
    %1896 = vmatprep.mubr.f32.mxu0 0.0
    %1897 = vmatmul.mubr.f32.gmra.mrb[0].mxu0 %v499
    %v1898 = vpop.f32.mrb[0].mxu0
    %v1899 = vadd.f32 %v1811, %v1898
    %v1900 = vpop.f32.mrb[0].mxu0
    %1901 = vdwg.mxu0
    %v1902 = vmax.f32 %v1879, 0.0
    %v1903 = vmax.f32 %v1884, 0.0
    %v1904 = vmax.f32 %v1889, 0.0
    %v1905 = vmax.f32 %v1894, 0.0
    %v1906 = vmax.f32 %v1899, 0.0
    %s1907 = scalar_lea.vmem [#allocation2], 448
    %v1908 = vld [vmem:[%s1907] sm:$0xff]
    %v1909 = vld [vmem:[%s1907 + $0x8] sm:$0xff]
    %v1910 = vld [vmem:[%s1907 + $0x10] sm:$0xff]
    %v1911 = vld [vmem:[%s1907 + $0x18] sm:$0xff]
    %v1912 = vld [vmem:[%s5 + $0xc] sm:$0x1]
    %v1913 = vlaneseq
    %v1914 = vshrl.u32 %v1913, 7
    %v1915 = vsub.s32 0, %v1914
    %v1916 = vrot.slane %v1912, %v1915
    %v1918 = vsel %vm146, %v1902, 0
    %v1921 = vsel %vm146, %v1903, 0
    %v1924 = vsel %vm146, %v1904, 0
    %v1927 = vsel %vm146, %v1905, 0
    %v1930 = vsel %vm146, %v1906, 0
    %1932 = vmatprep.subr.mxu0 0.0
    %1933 = vmatpush1.msra.mxu0 %v1908
    %1934 = vmatprep.subr.mxu0 0.0
    %1935 = vmatpush1.msra.mxu0 %v1909
    %1936 = vmatprep.subr.mxu0 0.0
    %1937 = vmatpush1.msra.mxu0 %v1910
    %1938 = vmatprep.subr.mxu0 0.0
    %1939 = vmatpush1.msra.mxu0 %v1911
    %1940 = vmatprep.subr.mxu0 0.0
    %1941 = vmatpush1.msra.mxu0 0.0
    %1942 = vmatprep.subr.mxu0 0.0
    %1943 = vmatpush1.msra.mxu0 0.0
    %1944 = vmatprep.subr.mxu0 0.0
    %1945 = vmatpush1.msra.mxu0 0.0
    %1946 = vmatprep.subr.mxu0 0.0
    %1947 = vmatpush1.msra.mxu0 0.0
    %1948 = vmatprep.subr.mxu0 0.0
    %1949 = vmatpush1.msra.mxu0 0.0
    %1950 = vmatprep.subr.mxu0 0.0
    %1951 = vmatpush1.msra.mxu0 0.0
    %1952 = vmatprep.subr.mxu0 0.0
    %1953 = vmatpush1.msra.mxu0 0.0
    %1954 = vmatprep.subr.mxu0 0.0
    %1955 = vmatpush1.msra.mxu0 0.0
    %1956 = vmatprep.subr.mxu0 0.0
    %1957 = vmatpush1.msra.mxu0 0.0
    %1958 = vmatprep.subr.mxu0 0.0
    %1959 = vmatpush1.msra.mxu0 0.0
    %1960 = vmatprep.subr.mxu0 0.0
    %1961 = vmatpush1.msra.mxu0 0.0
    %1962 = vmatprep.subr.mxu0 0.0
    %1963 = vmatpush1.msra.mxu0 0.0
    %1964 = vmatprep.subr.mxu0 0.0
    %1965 = vmatpush1.msra.mxu0 0.0
    %1966 = vmatprep.subr.mxu0 0.0
    %1967 = vmatpush1.msra.mxu0 0.0
    %1968 = vmatprep.subr.mxu0 0.0
    %1969 = vmatpush1.msra.mxu0 0.0
    %1970 = vmatprep.subr.mxu0 0.0
    %1971 = vmatpush1.msra.mxu0 0.0
    %1972 = vmatprep.subr.mxu0 0.0
    %1973 = vmatpush1.msra.mxu0 0.0
    %1974 = vmatprep.subr.mxu0 0.0
    %1975 = vmatpush1.msra.mxu0 0.0
    %1976 = vmatprep.subr.mxu0 0.0
    %1977 = vmatpush1.msra.mxu0 0.0
    %1978 = vmatprep.subr.mxu0 0.0
    %1979 = vmatpush1.msra.mxu0 0.0
    %1980 = vmatprep.subr.mxu0 0.0
    %1981 = vmatpush1.msra.mxu0 0.0
    %1982 = vmatprep.subr.mxu0 0.0
    %1983 = vmatpush1.msra.mxu0 0.0
    %1984 = vmatprep.subr.mxu0 0.0
    %1985 = vmatpush1.msra.mxu0 0.0
    %1986 = vmatprep.subr.mxu0 0.0
    %1987 = vmatpush1.msra.mxu0 0.0
    %1988 = vmatprep.subr.mxu0 0.0
    %1989 = vmatpush1.msra.mxu0 0.0
    %1990 = vmatprep.subr.mxu0 0.0
    %1991 = vmatpush1.msra.mxu0 0.0
    %1992 = vmatprep.subr.mxu0 0.0
    %1993 = vmatpush1.msra.mxu0 0.0
    %1994 = vmatprep.subr.mxu0 0.0
    %1995 = vmatpush1.msra.mxu0 0.0
    %1996 = vmatprep.mubr.f32.mxu0 0.0
    %1997 = vmatmul.mubr.f32.gmra.mrb[0].mxu0 %v1918
    %v1998 = vpop.f32.mrb[0].mxu0
    %v1999 = vadd.f32 %v1916, %v1998
    %v2000 = vpop.f32.mrb[0].mxu0
    %2001 = vmatprep.mubr.f32.mxu0 0.0
    %2002 = vmatmul.mubr.f32.gmra.mrb[0].mxu0 %v1921
    %v2003 = vpop.f32.mrb[0].mxu0
    %v2004 = vadd.f32 %v1916, %v2003
    %v2005 = vpop.f32.mrb[0].mxu0
    %2006 = vmatprep.mubr.f32.mxu0 0.0
    %2007 = vmatmul.mubr.f32.gmra.mrb[0].mxu0 %v1924
    %v2008 = vpop.f32.mrb[0].mxu0
    %v2009 = vadd.f32 %v1916, %v2008
    %v2010 = vpop.f32.mrb[0].mxu0
    %2011 = vmatprep.mubr.f32.mxu0 0.0
    %2012 = vmatmul.mubr.f32.gmra.mrb[0].mxu0 %v1927
    %v2013 = vpop.f32.mrb[0].mxu0
    %v2014 = vadd.f32 %v1916, %v2013
    %v2015 = vpop.f32.mrb[0].mxu0
    %2016 = vmatprep.mubr.f32.mxu0 0.0
    %2017 = vmatmul.mubr.f32.gmra.mrb[0].mxu0 %v1930
    %v2018 = vpop.f32.mrb[0].mxu0
    %v2019 = vadd.f32 %v1916, %v2018
    %v2020 = vpop.f32.mrb[0].mxu0
    %2021 = vdwg.mxu0
    %2022 = vmatprep.subr.mxu0 0.0
    %2023 = vmatpush1.msra.mxu0 %v1999
    %2024 = vmatprep.subr.mxu0 0.0
    %2025 = vmatpush1.msra.mxu0 %v2004
    %2026 = vmatprep.subr.mxu0 0.0
    %2027 = vmatpush1.msra.mxu0 %v2009
    %2028 = vmatprep.subr.mxu0 0.0
    %2029 = vmatpush1.msra.mxu0 %v2014
    %2030 = vmatprep.subr.mxu0 0.0
    %2031 = vmatpush1.msra.mxu0 %v2019
    %2032 = vmatprep.subr.mxu0 0.0
    %2033 = vmatpush1.msra.mxu0 0.0
    %2034 = vmatprep.subr.mxu0 0.0
    %2035 = vmatpush1.msra.mxu0 0.0
    %2036 = vmatprep.subr.mxu0 0.0
    %2037 = vmatpush1.msra.mxu0 0.0
    %2038 = vmatprep.subr.mxu0 0.0
    %2039 = vmatpush1.msra.mxu0 0.0
    %2040 = vmatprep.subr.mxu0 0.0
    %2041 = vmatpush1.msra.mxu0 0.0
    %2042 = vmatprep.subr.mxu0 0.0
    %2043 = vmatpush1.msra.mxu0 0.0
    %2044 = vmatprep.subr.mxu0 0.0
    %2045 = vmatpush1.msra.mxu0 0.0
    %2046 = vmatprep.subr.mxu0 0.0
    %2047 = vmatpush1.msra.mxu0 0.0
    %2048 = vmatprep.subr.mxu0 0.0
    %2049 = vmatpush1.msra.mxu0 0.0
    %2050 = vmatprep.subr.mxu0 0.0
    %2051 = vmatpush1.msra.mxu0 0.0
    %2052 = vmatprep.subr.mxu0 0.0
    %2053 = vmatpush1.msra.mxu0 0.0
    %2054 = vmatprep.subr.mxu0 0.0
    %2055 = vmatpush1.msra.mxu0 0.0
    %2056 = vmatprep.subr.mxu0 0.0
    %2057 = vmatpush1.msra.mxu0 0.0
    %2058 = vmatprep.subr.mxu0 0.0
    %2059 = vmatpush1.msra.mxu0 0.0
    %2060 = vmatprep.subr.mxu0 0.0
    %2061 = vmatpush1.msra.mxu0 0.0
    %2062 = vmatprep.subr.mxu0 0.0
    %2063 = vmatpush1.msra.mxu0 0.0
    %2064 = vmatprep.subr.mxu0 0.0
    %2065 = vmatpush1.msra.mxu0 0.0
    %2066 = vmatprep.subr.mxu0 0.0
    %2067 = vmatpush1.msra.mxu0 0.0
    %2068 = vmatprep.subr.mxu0 0.0
    %2069 = vmatpush1.msra.mxu0 0.0
    %2070 = vmatprep.subr.mxu0 0.0
    %2071 = vmatpush1.msra.mxu0 0.0
    %2072 = vmatprep.subr.mxu0 0.0
    %2073 = vmatpush1.msra.mxu0 0.0
    %2074 = vmatprep.subr.mxu0 0.0
    %2075 = vmatpush1.msra.mxu0 0.0
    %2076 = vmatprep.subr.mxu0 0.0
    %2077 = vmatpush1.msra.mxu0 0.0
    %2078 = vmatprep.subr.mxu0 0.0
    %2079 = vmatpush1.msra.mxu0 0.0
    %2080 = vmatprep.subr.mxu0 0.0
    %2081 = vmatpush1.msra.mxu0 0.0
    %2082 = vmatprep.subr.mxu0 0.0
    %2083 = vmatpush1.msra.mxu0 0.0
    %2084 = vmatprep.subr.mxu0 0.0
    %2085 = vmatpush1.msra.mxu0 0.0
    %2086 = vmatprep.mubr.f32.mxu0 0.0
    %2087 = vmatmul.mubr.f32.gmra.mrb[0].mxu0 %v713
    %v2088 = vpop.f32.mrb[0].mxu0
    %v2089 = vadd.f32 %v1638, %v2088
    %v2090 = vpop.f32.mrb[0].mxu0
    %2091 = vmatprep.mubr.f32.mxu0 0.0
    %2092 = vmatmul.mubr.f32.gmra.mrb[0].mxu0 %v716
    %v2093 = vpop.f32.mrb[0].mxu0
    %v2094 = vadd.f32 %v1643, %v2093
    %v2095 = vpop.f32.mrb[0].mxu0
    %2096 = vdwg.mxu0
    %v2097 = vld [vmem:[%s5 + $0xd] sm:$0x1]
    %v2098 = vlaneseq
    %v2099 = vshrl.u32 %v2098, 7
    %v2100 = vsub.s32 0, %v2099
    %v2101 = vrot.slane %v2097, %v2100
    %v2102 = vmul.f32 %v2089, %v2101
    %v2103 = vmul.f32 %v2094, %v2101
    %v2104 = vld [vmem:[%s5 + $0xe] sm:$0x1]
    %v2105 = vlaneseq
    %v2106 = vshrl.u32 %v2105, 7
    %v2107 = vsub.s32 0, %v2106
    %v2108 = vrot.slane %v2104, %v2107
    %v2109 = vadd.f32 %v2102, %v2108
    %v2110 = vadd.f32 %v2103, %v2108
    %v2111 = vmax.f32 %v2109, 0.0
    %v2112 = vmax.f32 %v2110, 0.0
    %v2113 = vadd.f32 %v2111, %v1460
    %v2114 = vadd.f32 %v2112, %v1461
    %v2115 = vsel %vm146, %v2113, 0.0
    %v2116 = vsel %vm146, %v2114, 0.0
    %v2117 = vadd.f32 %v2115, %v2116
    %v2118 = vrot.slane %v2117, 4
    %v2119 = vadd.f32 %v2117, %v2118
    %v2120 = vrot.slane %v2119, 2
    %v2121 = vadd.f32 %v2119, %v2120
    %v2122 = vrot.slane %v2121, 1
    %v2123 = vadd.f32 %v2121, %v2122
    %s2124 = scalar_lea.vmem [#allocation2], 480
    %v2125 = vld [vmem:[%s2124] sm:$0xff]
    %v2126 = vld [vmem:[%s2124 + $0x8] sm:$0xff]
    %v2127 = vld [vmem:[%s2124 + $0x10] sm:$0xff]
    %v2128 = vld [vmem:[%s2124 + $0x18] sm:$0xff]
    %v2129 = vld [vmem:[%s5 + $0xf] sm:$0x1]
    %v2131 = vsel %vm146, %v2123, 0
    %2133 = vmatprep.subr.mxu0 0.0
    %2134 = vmatpush1.msra.mxu0 %v2125
    %2135 = vmatprep.subr.mxu0 0.0
    %2136 = vmatpush1.msra.mxu0 %v2126
    %2137 = vmatprep.subr.mxu0 0.0
    %2138 = vmatpush1.msra.mxu0 %v2127
    %2139 = vmatprep.subr.mxu0 0.0
    %2140 = vmatpush1.msra.mxu0 %v2128
    %2141 = vmatprep.subr.mxu0 0.0
    %2142 = vmatpush1.msra.mxu0 0.0
    %2143 = vmatprep.subr.mxu0 0.0
    %2144 = vmatpush1.msra.mxu0 0.0
    %2145 = vmatprep.subr.mxu0 0.0
    %2146 = vmatpush1.msra.mxu0 0.0
    %2147 = vmatprep.subr.mxu0 0.0
    %2148 = vmatpush1.msra.mxu0 0.0
    %2149 = vmatprep.subr.mxu0 0.0
    %2150 = vmatpush1.msra.mxu0 0.0
    %2151 = vmatprep.subr.mxu0 0.0
    %2152 = vmatpush1.msra.mxu0 0.0
    %2153 = vmatprep.subr.mxu0 0.0
    %2154 = vmatpush1.msra.mxu0 0.0
    %2155 = vmatprep.subr.mxu0 0.0
    %2156 = vmatpush1.msra.mxu0 0.0
    %2157 = vmatprep.subr.mxu0 0.0
    %2158 = vmatpush1.msra.mxu0 0.0
    %2159 = vmatprep.subr.mxu0 0.0
    %2160 = vmatpush1.msra.mxu0 0.0
    %2161 = vmatprep.subr.mxu0 0.0
    %2162 = vmatpush1.msra.mxu0 0.0
    %2163 = vmatprep.subr.mxu0 0.0
    %2164 = vmatpush1.msra.mxu0 0.0
    %2165 = vmatprep.subr.mxu0 0.0
    %2166 = vmatpush1.msra.mxu0 0.0
    %2167 = vmatprep.subr.mxu0 0.0
    %2168 = vmatpush1.msra.mxu0 0.0
    %2169 = vmatprep.subr.mxu0 0.0
    %2170 = vmatpush1.msra.mxu0 0.0
    %2171 = vmatprep.subr.mxu0 0.0
    %2172 = vmatpush1.msra.mxu0 0.0
    %2173 = vmatprep.subr.mxu0 0.0
    %2174 = vmatpush1.msra.mxu0 0.0
    %2175 = vmatprep.subr.mxu0 0.0
    %2176 = vmatpush1.msra.mxu0 0.0
    %2177 = vmatprep.subr.mxu0 0.0
    %2178 = vmatpush1.msra.mxu0 0.0
    %2179 = vmatprep.subr.mxu0 0.0
    %2180 = vmatpush1.msra.mxu0 0.0
    %2181 = vmatprep.subr.mxu0 0.0
    %2182 = vmatpush1.msra.mxu0 0.0
    %2183 = vmatprep.subr.mxu0 0.0
    %2184 = vmatpush1.msra.mxu0 0.0
    %2185 = vmatprep.subr.mxu0 0.0
    %2186 = vmatpush1.msra.mxu0 0.0
    %2187 = vmatprep.subr.mxu0 0.0
    %2188 = vmatpush1.msra.mxu0 0.0
    %2189 = vmatprep.subr.mxu0 0.0
    %2190 = vmatpush1.msra.mxu0 0.0
    %2191 = vmatprep.subr.mxu0 0.0
    %2192 = vmatpush1.msra.mxu0 0.0
    %2193 = vmatprep.subr.mxu0 0.0
    %2194 = vmatpush1.msra.mxu0 0.0
    %2195 = vmatprep.subr.mxu0 0.0
    %2196 = vmatpush1.msra.mxu0 0.0
    %2197 = vmatprep.mubr.f32.mxu0 0.0
    %2198 = vmatmul.mubr.f32.gmra.mrb[0].mxu0 %v2131
    %v2199 = vpop.f32.mrb[0].mxu0
    %v2200 = vadd.f32 %v2129, %v2199
    %v2201 = vpop.f32.mrb[0].mxu0
    %2202 = vdwg.mxu0
    %v2203 = vmax.f32 %v2200, 0.0
    %v2204 = vld [vmem:[%s6] sm:$0xff]
    %v2205 = vld [vmem:[%s6 + $0x8] sm:$0xff]
    %v2206 = vld [vmem:[%s6 + $0x10] sm:$0xff]
    %v2207 = vld [vmem:[%s6 + $0x18] sm:$0xff]
    %v2208 = vld [vmem:[%s7] sm:$0x1]
    %v2210 = vsel %vm146, %v2203, 0
    %2212 = vmatprep.subr.mxu0 0.0
    %2213 = vmatpush1.msra.mxu0 %v2204
    %2214 = vmatprep.subr.mxu0 0.0
    %2215 = vmatpush1.msra.mxu0 %v2205
    %2216 = vmatprep.subr.mxu0 0.0
    %2217 = vmatpush1.msra.mxu0 %v2206
    %2218 = vmatprep.subr.mxu0 0.0
    %2219 = vmatpush1.msra.mxu0 %v2207
    %2220 = vmatprep.subr.mxu0 0.0
    %2221 = vmatpush1.msra.mxu0 0.0
    %2222 = vmatprep.subr.mxu0 0.0
    %2223 = vmatpush1.msra.mxu0 0.0
    %2224 = vmatprep.subr.mxu0 0.0
    %2225 = vmatpush1.msra.mxu0 0.0
    %2226 = vmatprep.subr.mxu0 0.0
    %2227 = vmatpush1.msra.mxu0 0.0
    %2228 = vmatprep.subr.mxu0 0.0
    %2229 = vmatpush1.msra.mxu0 0.0
    %2230 = vmatprep.subr.mxu0 0.0
    %2231 = vmatpush1.msra.mxu0 0.0
    %2232 = vmatprep.subr.mxu0 0.0
    %2233 = vmatpush1.msra.mxu0 0.0
    %2234 = vmatprep.subr.mxu0 0.0
    %2235 = vmatpush1.msra.mxu0 0.0
    %2236 = vmatprep.subr.mxu0 0.0
    %2237 = vmatpush1.msra.mxu0 0.0
    %2238 = vmatprep.subr.mxu0 0.0
    %2239 = vmatpush1.msra.mxu0 0.0
    %2240 = vmatprep.subr.mxu0 0.0
    %2241 = vmatpush1.msra.mxu0 0.0
    %2242 = vmatprep.subr.mxu0 0.0
    %2243 = vmatpush1.msra.mxu0 0.0
    %2244 = vmatprep.subr.mxu0 0.0
    %2245 = vmatpush1.msra.mxu0 0.0
    %2246 = vmatprep.subr.mxu0 0.0
    %2247 = vmatpush1.msra.mxu0 0.0
    %2248 = vmatprep.subr.mxu0 0.0
    %2249 = vmatpush1.msra.mxu0 0.0
    %2250 = vmatprep.subr.mxu0 0.0
    %2251 = vmatpush1.msra.mxu0 0.0
    %2252 = vmatprep.subr.mxu0 0.0
    %2253 = vmatpush1.msra.mxu0 0.0
    %2254 = vmatprep.subr.mxu0 0.0
    %2255 = vmatpush1.msra.mxu0 0.0
    %2256 = vmatprep.subr.mxu0 0.0
    %2257 = vmatpush1.msra.mxu0 0.0
    %2258 = vmatprep.subr.mxu0 0.0
    %2259 = vmatpush1.msra.mxu0 0.0
    %2260 = vmatprep.subr.mxu0 0.0
    %2261 = vmatpush1.msra.mxu0 0.0
    %2262 = vmatprep.subr.mxu0 0.0
    %2263 = vmatpush1.msra.mxu0 0.0
    %2264 = vmatprep.subr.mxu0 0.0
    %2265 = vmatpush1.msra.mxu0 0.0
    %2266 = vmatprep.subr.mxu0 0.0
    %2267 = vmatpush1.msra.mxu0 0.0
    %2268 = vmatprep.subr.mxu0 0.0
    %2269 = vmatpush1.msra.mxu0 0.0
    %2270 = vmatprep.subr.mxu0 0.0
    %2271 = vmatpush1.msra.mxu0 0.0
    %2272 = vmatprep.subr.mxu0 0.0
    %2273 = vmatpush1.msra.mxu0 0.0
    %2274 = vmatprep.subr.mxu0 0.0
    %2275 = vmatpush1.msra.mxu0 0.0
    %2276 = vmatprep.mubr.f32.mxu0 0.0
    %2277 = vmatmul.mubr.f32.gmra.mrb[0].mxu0 %v2210
    %v2278 = vpop.f32.mrb[0].mxu0
    %v2279 = vadd.f32 %v2208, %v2278
    %v2280 = vpop.f32.mrb[0].mxu0
    %2281 = vdwg.mxu0
    %v2282 = vlaneseq
    %v2283 = vshrl.u32 %v2282, 7
    %v2284 = vsub.s32 0, %v2283
    %v2285 = vrot.slane %v2279, %v2284
    %2286 = vst [vmem:[#allocation5] sm:$0xff] %v2285
    // Predicated region
    $region38: #{tpu_custom_call.1} parent=1 // pred_check
      _
    $region39: #{tpu_custom_call.1} parent=1 // pred_check_branch
      %2288 = sbr.rel (0) target = $region41
    $region40: #{tpu_custom_call.1} parent=1 // pred_region
      %s2290 = ssub.s32 128, 128
      %2291 = vsyncadd [#allocation4], %s2290
      %s2293 = sshll.u32 [#allocation5], 4
      %s2294 = int_to_ptr.vmem [resolvable:$true] %s2293
      %2296 = dma.vmem_to_hbm [thread:$0]  %s2294, 128, %s8, [#allocation4]
    $region41: #{tpu_custom_call.1} parent=1 // pred_fallthru
      _
    // Predicated region
    $region42: #{tpu_custom_call.1} parent=1 // pred_check
      _
    $region43: #{tpu_custom_call.1} parent=1 // pred_check_branch
      %2298 = sbr.rel (0) target = $region45
    $region44: #{tpu_custom_call.1} parent=1 // pred_region
      %2299 = dma.done [#allocation4], 128
    $region45: #{tpu_custom_call.1} parent=1 // pred_fallthru
      _
    %2300 = vsyncpa [#allocation3], 1
    %2301 = vsyncpa [#allocation4], 1

</llo_original>
